<compile_context>
chip_gen: v6e
topology: v6e:2x2x1
jax: 0.10.0
libtpu: 0.0.40
codegen_flags: <defaults>
</compile_context>

<pallas_src>
import functools

import jax
import jax.numpy as jnp
from jax.experimental import pallas as pl
from jax.experimental.pallas import tpu as pltpu


# ----------------------------------------------------------------------------
# Kernels
# ----------------------------------------------------------------------------
def ffm_pool_kernel(x1_ref, x2_ref, w1a_ref, w1b_ref, scale_ref, shift_ref,
                    psum_ref, *, hw, tile, needs_mask):
    """Pass 1.  Grid = (B, nT), both axes parallel.

    x1_ref:    (1, C1, T)      fsp tile (channel-major)
    x2_ref:    (1, C2, T)      fcp tile
    w1a_ref:   (Cout, C1)      1x1 conv weight rows for the fsp channels
    w1b_ref:   (Cout, C2)      1x1 conv weight rows for the fcp channels
    scale_ref: (Cout, 1)       folded BN scale
    shift_ref: (Cout, 1)       folded BN shift
    psum_ref:  (1, 1, Cout, 1) per-tile per-channel partial sum (independent
                               block per (b, t) -> fully parallel grid)
    """
    acc = jnp.dot(w1a_ref[...], x1_ref[0], preferred_element_type=jnp.float32)
    acc = acc + jnp.dot(w1b_ref[...], x2_ref[0],
                        preferred_element_type=jnp.float32)
    feat = jnp.maximum(acc * scale_ref[...] + shift_ref[...], 0.0)
    if needs_mask:
        # Zero out the HW-padding columns so they don't bias the avg pool.
        t = pl.program_id(1)
        pos = t * tile + jax.lax.broadcasted_iota(jnp.int32, feat.shape, 1)
        feat = jnp.where(pos < hw, feat, 0.0)
    psum_ref[0, 0] = jnp.sum(feat, axis=1, keepdims=True)


def ffm_out_kernel(x1_ref, x2_ref, w1a_ref, w1b_ref, scale_ref, shift_ref,
                   mean_ref, wa1t_ref, wa2t_ref, o_ref):
    """Pass 2.  Grid = (B, nT), both axes parallel.

    Recomputes ConvBNReLU(feat) from x1/x2 (cheaper than reloading a
    materialized feat from HBM), computes the attention gate from the pooled
    mean, and writes out = feat * (sigmoid(attn) + 1).

    mean_ref:  (1, Cout, 128)  pooled mean, lane-broadcast to 128
    wa1t_ref:  (Cmid, Cout)    attention conv1 weight (transposed)
    wa2t_ref:  (Cout, Cmid)    attention conv2 weight (transposed)
    o_ref:     (1, Cout, T)    lane-dense output tile
    """
    acc = jnp.dot(w1a_ref[...], x1_ref[0], preferred_element_type=jnp.float32)
    acc = acc + jnp.dot(w1b_ref[...], x2_ref[0],
                        preferred_element_type=jnp.float32)
    feat = jnp.maximum(acc * scale_ref[...] + shift_ref[...], 0.0)

    # Tiny attention MLP, recomputed per tile (O(Cout*Cmid) MACs — noise vs
    # the Cin x Cout x T main matmul).  Minor dims are >= 128 everywhere.
    a = jnp.dot(wa1t_ref[...], mean_ref[0], preferred_element_type=jnp.float32)
    a = jnp.maximum(a, 0.0)
    a = jnp.dot(wa2t_ref[...], a, preferred_element_type=jnp.float32)
    gate = 1.0 / (1.0 + jnp.exp(-a)) + 1.0            # sigmoid(a) + 1, f32

    # feat*atten + feat == feat * (sigmoid(attn) + 1); per-channel broadcast.
    o_ref[0] = (feat * gate[:, :1]).astype(o_ref.dtype)


# ----------------------------------------------------------------------------
# Tiling / wrapper
# ----------------------------------------------------------------------------
def _round_up(x, m):
    return ((x + m - 1) // m) * m


def _vmem_capacity_bytes():
    try:
        info = pltpu.get_tpu_info()
        v = getattr(info, "vmem_capacity_bytes", None)
        if v:
            return int(v)
    except Exception:
        pass
    return 64 * 1024 * 1024  # conservative (v7x-sized) fallback


def _choose_tiling(hw, c_total, max_hw_tile):
    """Pick (tile, n_tiles, vmem_limit_bytes) from per-generation VMEM size.

    Per grid step the big movers are ~2 * c_total * tile * 4 bytes (double
    buffered inputs + output); keep that under half the scoped VMEM budget.
    """
    vmem = _vmem_capacity_bytes()
    vmem_limit = max(32 * 1024 * 1024, min((vmem * 3) // 4, 100 * 1024 * 1024))
    hw128 = _round_up(hw, 128)
    bytes_per_t = 2 * c_total * 4
    cap = (vmem_limit // 2) // bytes_per_t
    cap = max(128, min(cap, max_hw_tile, hw128))
    cap = max(128, (cap // 128) * 128)
    if hw128 <= cap:
        return hw128, 1, vmem_limit
    n_tiles = -(-hw // cap)                       # ceil
    tile = _round_up(-(-hw // n_tiles), 128)      # balanced tiles, lane-aligned
    return tile, n_tiles, vmem_limit


@functools.partial(jax.jit, static_argnames=("tile", "n_tiles", "vmem_limit"))
def _ffm_impl(fsp, fcp, w1, bn_scale, bn_shift, wa1, wa2, *,
              tile, n_tiles, vmem_limit):
    B, C1, H, W = fsp.shape
    C2 = fcp.shape[1]
    Cout = w1.shape[1]
    Cmid = wa1.shape[1]
    HW = H * W
    HW_p = tile * n_tiles
    needs_mask = HW_p != HW

    # Channel-major flatten: pure reshapes of contiguous trailing dims.
    x1 = fsp.reshape(B, C1, HW)
    x2 = fcp.reshape(B, C2, HW)
    if needs_mask:
        pad = HW_p - HW
        x1 = jnp.pad(x1, ((0, 0), (0, 0), (0, pad)))
        x2 = jnp.pad(x2, ((0, 0), (0, 0), (0, pad)))

    # Tiny parameter reshapes/transposes (done once by XLA).
    w1a = w1[:C1].T.astype(jnp.float32)           # (Cout, C1)
    w1b = w1[C1:].T.astype(jnp.float32)           # (Cout, C2)
    scale = bn_scale.reshape(Cout, 1).astype(jnp.float32)
    shift = bn_shift.reshape(Cout, 1).astype(jnp.float32)
    wa1t = wa1.T.astype(jnp.float32)              # (Cmid, Cout)
    wa2t = wa2.T.astype(jnp.float32)              # (Cout, Cmid)

    cparams = pltpu.CompilerParams(
        dimension_semantics=("parallel", "parallel"),
        vmem_limit_bytes=vmem_limit)

    # ---- Pass 1: per-tile per-channel partial sums (no feat materialized) --
    pool_kernel = functools.partial(ffm_pool_kernel, hw=HW, tile=tile,
                                    needs_mask=needs_mask)
    psum = pl.pallas_call(
        pool_kernel,
        out_shape=jax.ShapeDtypeStruct((B, n_tiles, Cout, 1), jnp.float32),
        grid_spec=pltpu.PrefetchScalarGridSpec(
            num_scalar_prefetch=0,
            grid=(B, n_tiles),
            in_specs=[
                pl.BlockSpec((1, C1, tile), lambda b, t: (b, 0, t)),
                pl.BlockSpec((1, C2, tile), lambda b, t: (b, 0, t)),
                pl.BlockSpec((Cout, C1), lambda b, t: (0, 0)),
                pl.BlockSpec((Cout, C2), lambda b, t: (0, 0)),
                pl.BlockSpec((Cout, 1), lambda b, t: (0, 0)),
                pl.BlockSpec((Cout, 1), lambda b, t: (0, 0)),
            ],
            out_specs=pl.BlockSpec((1, 1, Cout, 1), lambda b, t: (b, t, 0, 0)),
        ),
        compiler_params=cparams,
    )(x1, x2, w1a, w1b, scale, shift)

    # Tiny reduction over the tile axis -> pooled mean; lane-broadcast to 128
    # so the in-kernel attention dots stay lane-dense.
    mean = jnp.sum(psum, axis=1) * (1.0 / HW)               # (B, Cout, 1) f32
    mean_b = jnp.broadcast_to(mean, (B, Cout, 128))

    # ---- Pass 2: recompute ConvBNReLU, compute gate in-kernel, apply -------
    out = pl.pallas_call(
        ffm_out_kernel,
        out_shape=jax.ShapeDtypeStruct((B, Cout, HW_p), fsp.dtype),
        grid_spec=pltpu.PrefetchScalarGridSpec(
            num_scalar_prefetch=0,
            grid=(B, n_tiles),
            in_specs=[
                pl.BlockSpec((1, C1, tile), lambda b, t: (b, 0, t)),
                pl.BlockSpec((1, C2, tile), lambda b, t: (b, 0, t)),
                pl.BlockSpec((Cout, C1), lambda b, t: (0, 0)),
                pl.BlockSpec((Cout, C2), lambda b, t: (0, 0)),
                pl.BlockSpec((Cout, 1), lambda b, t: (0, 0)),
                pl.BlockSpec((Cout, 1), lambda b, t: (0, 0)),
                pl.BlockSpec((1, Cout, 128), lambda b, t: (b, 0, 0)),
                pl.BlockSpec((Cmid, Cout), lambda b, t: (0, 0)),
                pl.BlockSpec((Cout, Cmid), lambda b, t: (0, 0)),
            ],
            out_specs=pl.BlockSpec((1, Cout, tile), lambda b, t: (b, 0, t)),
        ),
        compiler_params=cparams,
    )(x1, x2, w1a, w1b, scale, shift, mean_b, wa1t, wa2t)

    if needs_mask:
        out = out[:, :, :HW]
    return out.reshape(B, Cout, H, W)


def feature_fusion_forward(fsp, fcp, w1, bn_scale, bn_shift, wa1, wa2, *,
                           max_hw_tile=65536):
    """fsp, fcp: NCHW.  w1: (Cin, Cout).  Returns NCHW (dtype of fsp)."""
    B, C1, H, W = fsp.shape
    C2 = fcp.shape[1]
    Cout = w1.shape[1]
    tile, n_tiles, vmem_limit = _choose_tiling(H * W, C1 + C2 + Cout,
                                               max_hw_tile)
    return _ffm_impl(fsp, fcp, w1, bn_scale, bn_shift, wa1, wa2,
                     tile=tile, n_tiles=n_tiles, vmem_limit=vmem_limit)


# ----------------------------------------------------------------------------
# Pure-JAX reference (same math, no Pallas) for validation
# ----------------------------------------------------------------------------
def reference_forward(fsp, fcp, w1, bn_scale, bn_shift, wa1, wa2):
    x = jnp.concatenate([fsp, fcp], axis=1)                  # (B, Cin, H, W)
    xf = jnp.transpose(x, (0, 2, 3, 1))                      # (B, H, W, Cin)
    feat = jnp.einsum('bhwc,cd->bhwd', xf, w1)
    feat = jnp.maximum(feat * bn_scale + bn_shift, 0.0)      # (B, H, W, Cout)
    atten = jnp.mean(feat, axis=(1, 2))                      # (B, Cout)
    a = jnp.maximum(atten @ wa1, 0.0)
    a = jax.nn.sigmoid(a @ wa2)                              # (B, Cout)
    out = feat * a[:, None, None, :] + feat
    return jnp.transpose(out, (0, 3, 1, 2))


# ----------------------------------------------------------------------------
# Self-test
# ----------------------------------------------------------------------------
if __name__ == "__main__":
    def make_params(key, cin, cout):
        cmid = max(1, cout // 4)
        k_w1, k_wa1, k_wa2, k_g, k_b, k_m, k_v = jax.random.split(key, 7)
        w1 = jax.random.normal(k_w1, (cin, cout), jnp.float32) * (2.0 / cin) ** 0.5
        wa1 = jax.random.normal(k_wa1, (cout, cmid), jnp.float32) * (2.0 / cout) ** 0.5
        wa2 = jax.random.normal(k_wa2, (cmid, cout), jnp.float32) * (2.0 / cmid) ** 0.5
        gamma = 1.0 + 0.1 * jax.random.normal(k_g, (cout,), jnp.float32)
        beta = 0.1 * jax.random.normal(k_b, (cout,), jnp.float32)
        mu = 0.1 * jax.random.normal(k_m, (cout,), jnp.float32)
        var = jnp.abs(1.0 + 0.1 * jax.random.normal(k_v, (cout,), jnp.float32))
        eps = 1e-5
        scale = gamma / jnp.sqrt(var + eps)
        shift = beta - mu * scale
        return w1, scale, shift, wa1, wa2

    key = jax.random.PRNGKey(0)
    k1, k2, k3, k4, k5 = jax.random.split(key, 5)

    # --- Case 1: canonical small shapes (2,4,16,16)+(2,4,16,16), Cout=16 ----
    B, Csp, Ccp, H, W, Cout = 2, 4, 4, 16, 16, 16
    fsp = jax.random.normal(k1, (B, Csp, H, W), jnp.float32)
    fcp = jax.random.normal(k2, (B, Ccp, H, W), jnp.float32)
    w1, bn_scale, bn_shift, wa1, wa2 = make_params(k3, Csp + Ccp, Cout)
    ref = reference_forward(fsp, fcp, w1, bn_scale, bn_shift, wa1, wa2)

    # Default VMEM-sized tile (single tile here) and a forced 2-tile split
    # (exercises the fully-parallel partial-sum pooling path).
    for max_tile in (65536, 128):
        out = feature_fusion_forward(fsp, fcp, w1, bn_scale, bn_shift,
                                     wa1, wa2, max_hw_tile=max_tile)
        out = jax.block_until_ready(out)
        assert out.shape == (B, Cout, H, W)
        assert jnp.allclose(out, ref, atol=1e-4, rtol=1e-4), (
            f"mismatch vs reference (max_hw_tile={max_tile})")

    # --- Case 2: odd spatial size -> exercises HW padding + in-kernel mask --
    B2, Csp2, Ccp2, H2, W2, Cout2 = 2, 4, 4, 15, 17, 16
    fsp2 = jax.random.normal(k4, (B2, Csp2, H2, W2), jnp.float32)
    fcp2 = jax.random.normal(k5, (B2, Ccp2, H2, W2), jnp.float32)
    w1o, sc2, sh2, wa1o, wa2o = make_params(k3, Csp2 + Ccp2, Cout2)
    out2 = feature_fusion_forward(fsp2, fcp2, w1o, sc2, sh2, wa1o, wa2o,
                                  max_hw_tile=128)
    out2 = jax.block_until_ready(out2)
    ref2 = reference_forward(fsp2, fcp2, w1o, sc2, sh2, wa1o, wa2o)
    assert out2.shape == (B2, Cout2, H2, W2)
    assert jnp.allclose(out2, ref2, atol=1e-4, rtol=1e-4), "mismatch (odd HW)"

    print("KERNEL_OK")
</pallas_src>

<mosaic_0001>
module attributes {stable_mosaic.version = 11 : i64} {
  func.func @ffm_pool_kernel(%arg0: i32, %arg1: i32, %arg2: memref<1x4x256xf32, #tpu.memory_space<vmem>>, %arg3: memref<1x4x256xf32, #tpu.memory_space<vmem>>, %arg4: memref<16x4xf32, #tpu.memory_space<vmem>>, %arg5: memref<16x4xf32, #tpu.memory_space<vmem>>, %arg6: memref<16x1xf32, #tpu.memory_space<vmem>>, %arg7: memref<16x1xf32, #tpu.memory_space<vmem>>, %arg8: memref<1x1x16x1xf32, #tpu.memory_space<vmem>>) attributes {dimension_semantics = [#tpu.dimension_semantics<parallel>, #tpu.dimension_semantics<parallel>], iteration_bounds = array<i64: 2, 1>, scalar_prefetch = 0 : i64, scratch_operands = 0 : i64, tpu.core_type = #tpu.core_type<tc>, window_params = [{transform_indices = @transform_0, window_bounds = array<i64: 1, 4, 256>}, {transform_indices = @transform_1, window_bounds = array<i64: 1, 4, 256>}, {pipeline_mode = #tpu.pipeline_mode<synchronous>, transform_indices = @transform_2, window_bounds = array<i64: 16, 4>}, {pipeline_mode = #tpu.pipeline_mode<synchronous>, transform_indices = @transform_3, window_bounds = array<i64: 16, 4>}, {pipeline_mode = #tpu.pipeline_mode<synchronous>, transform_indices = @transform_4, window_bounds = array<i64: 16, 1>}, {pipeline_mode = #tpu.pipeline_mode<synchronous>, transform_indices = @transform_5, window_bounds = array<i64: 16, 1>}, {transform_indices = @transform_6, window_bounds = array<i64: 1, 1, 16, 1>}]} {
    %c0 = arith.constant 0 : index
    %c0_0 = arith.constant 0 : index
    %0 = vector.load %arg4[%c0, %c0_0] : memref<16x4xf32, #tpu.memory_space<vmem>>, vector<16x4xf32>
    %c0_1 = arith.constant 0 : index
    %c0_2 = arith.constant 0 : index
    %c0_3 = arith.constant 0 : index
    %1 = vector.load %arg2[%c0_1, %c0_2, %c0_3] : memref<1x4x256xf32, #tpu.memory_space<vmem>>, vector<1x4x256xf32>
    %2 = vector.shape_cast %1 : vector<1x4x256xf32> to vector<4x256xf32>
    %cst = arith.constant dense<0.000000e+00> : vector<16x256xf32>
    %3 = tpu.matmul %0, %2, %cst {dimension_numbers = #tpu.dot_dimension_numbers<[1], [0], [0], [1], [0, 0, 1, 1], [], []>} : vector<16x4xf32>, vector<4x256xf32>, vector<16x256xf32> -> vector<16x256xf32>
    %c0_4 = arith.constant 0 : index
    %c0_5 = arith.constant 0 : index
    %4 = vector.load %arg5[%c0_4, %c0_5] : memref<16x4xf32, #tpu.memory_space<vmem>>, vector<16x4xf32>
    %c0_6 = arith.constant 0 : index
    %c0_7 = arith.constant 0 : index
    %c0_8 = arith.constant 0 : index
    %5 = vector.load %arg3[%c0_6, %c0_7, %c0_8] : memref<1x4x256xf32, #tpu.memory_space<vmem>>, vector<1x4x256xf32>
    %6 = vector.shape_cast %5 : vector<1x4x256xf32> to vector<4x256xf32>
    %cst_9 = arith.constant dense<0.000000e+00> : vector<16x256xf32>
    %7 = tpu.matmul %4, %6, %cst_9 {dimension_numbers = #tpu.dot_dimension_numbers<[1], [0], [0], [1], [0, 0, 1, 1], [], []>} : vector<16x4xf32>, vector<4x256xf32>, vector<16x256xf32> -> vector<16x256xf32>
    %8 = arith.addf %3, %7 : vector<16x256xf32>
    %c0_10 = arith.constant 0 : index
    %c0_11 = arith.constant 0 : index
    %9 = vector.load %arg6[%c0_10, %c0_11] : memref<16x1xf32, #tpu.memory_space<vmem>>, vector<16x1xf32>
    %10 = vector.broadcast %9 : vector<16x1xf32> to vector<16x256xf32>
    %11 = arith.mulf %8, %10 : vector<16x256xf32>
    %c0_12 = arith.constant 0 : index
    %c0_13 = arith.constant 0 : index
    %12 = vector.load %arg7[%c0_12, %c0_13] : memref<16x1xf32, #tpu.memory_space<vmem>>, vector<16x1xf32>
    %13 = vector.broadcast %12 : vector<16x1xf32> to vector<16x256xf32>
    %14 = arith.addf %11, %13 : vector<16x256xf32>
    %cst_14 = arith.constant 0.000000e+00 : f32
    %15 = vector.broadcast %cst_14 : f32 to vector<16x256xf32>
    %16 = arith.maximumf %14, %15 : vector<16x256xf32>
    %cst_15 = arith.constant dense<0.000000e+00> : vector<16xf32>
    %17 = vector.multi_reduction <add>, %16, %cst_15 [1] : vector<16x256xf32> to vector<16xf32>
    %18 = vector.shape_cast %17 : vector<16xf32> to vector<16x1xf32>
    %c0_16 = arith.constant 0 : index
    %c0_17 = arith.constant 0 : index
    %c0_18 = arith.constant 0 : index
    %c0_19 = arith.constant 0 : index
    %19 = vector.load %arg8[%c0_16, %c0_17, %c0_18, %c0_19] : memref<1x1x16x1xf32, #tpu.memory_space<vmem>>, vector<1x1x16x1xf32>
    %20 = vector.shape_cast %19 : vector<1x1x16x1xf32> to vector<16x1xf32>
    %21 = vector.shape_cast %18 : vector<16x1xf32> to vector<1x1x16x1xf32>
    tpu.vector_store %arg8[%c0_16, %c0_17, %c0_18, %c0_19], %21 {strides = array<i32>} : memref<1x1x16x1xf32, #tpu.memory_space<vmem>>, vector<1x1x16x1xf32>,
    return
  }
  func.func @transform_0(%arg0: i32, %arg1: i32) -> (i32, i32, i32) {
    %c0_i32 = arith.constant 0 : i32
    %c0_i32_0 = arith.constant 0 : i32
    return %arg0, %c0_i32, %arg1 : i32, i32, i32
  }
  func.func @transform_1(%arg0: i32, %arg1: i32) -> (i32, i32, i32) {
    %c0_i32 = arith.constant 0 : i32
    %c0_i32_0 = arith.constant 0 : i32
    return %arg0, %c0_i32, %arg1 : i32, i32, i32
  }
  func.func @transform_2(%arg0: i32, %arg1: i32) -> (i32, i32) {
    %c0_i32 = arith.constant 0 : i32
    %c0_i32_0 = arith.constant 0 : i32
    %c0_i32_1 = arith.constant 0 : i32
    return %c0_i32, %c0_i32_0 : i32, i32
  }
  func.func @transform_3(%arg0: i32, %arg1: i32) -> (i32, i32) {
    %c0_i32 = arith.constant 0 : i32
    %c0_i32_0 = arith.constant 0 : i32
    %c0_i32_1 = arith.constant 0 : i32
    return %c0_i32, %c0_i32_0 : i32, i32
  }
  func.func @transform_4(%arg0: i32, %arg1: i32) -> (i32, i32) {
    %c0_i32 = arith.constant 0 : i32
    %c0_i32_0 = arith.constant 0 : i32
    %c0_i32_1 = arith.constant 0 : i32
    return %c0_i32, %c0_i32_0 : i32, i32
  }
  func.func @transform_5(%arg0: i32, %arg1: i32) -> (i32, i32) {
    %c0_i32 = arith.constant 0 : i32
    %c0_i32_0 = arith.constant 0 : i32
    %c0_i32_1 = arith.constant 0 : i32
    return %c0_i32, %c0_i32_0 : i32, i32
  }
  func.func @transform_6(%arg0: i32, %arg1: i32) -> (i32, i32, i32, i32) {
    %c0_i32 = arith.constant 0 : i32
    %c0_i32_0 = arith.constant 0 : i32
    %c0_i32_1 = arith.constant 0 : i32
    return %arg0, %arg1, %c0_i32, %c0_i32_0 : i32, i32, i32, i32
  }
}

module attributes {stable_mosaic.version = 11 : i64} {
  func.func @ffm_out_kernel(%arg0: i32, %arg1: i32, %arg2: memref<1x4x256xf32, #tpu.memory_space<vmem>>, %arg3: memref<1x4x256xf32, #tpu.memory_space<vmem>>, %arg4: memref<16x4xf32, #tpu.memory_space<vmem>>, %arg5: memref<16x4xf32, #tpu.memory_space<vmem>>, %arg6: memref<16x1xf32, #tpu.memory_space<vmem>>, %arg7: memref<16x1xf32, #tpu.memory_space<vmem>>, %arg8: memref<1x16x128xf32, #tpu.memory_space<vmem>>, %arg9: memref<4x16xf32, #tpu.memory_space<vmem>>, %arg10: memref<16x4xf32, #tpu.memory_space<vmem>>, %arg11: memref<1x16x256xf32, #tpu.memory_space<vmem>>) attributes {dimension_semantics = [#tpu.dimension_semantics<parallel>, #tpu.dimension_semantics<parallel>], iteration_bounds = array<i64: 2, 1>, scalar_prefetch = 0 : i64, scratch_operands = 0 : i64, tpu.core_type = #tpu.core_type<tc>, window_params = [{transform_indices = @transform_0, window_bounds = array<i64: 1, 4, 256>}, {transform_indices = @transform_1, window_bounds = array<i64: 1, 4, 256>}, {pipeline_mode = #tpu.pipeline_mode<synchronous>, transform_indices = @transform_2, window_bounds = array<i64: 16, 4>}, {pipeline_mode = #tpu.pipeline_mode<synchronous>, transform_indices = @transform_3, window_bounds = array<i64: 16, 4>}, {pipeline_mode = #tpu.pipeline_mode<synchronous>, transform_indices = @transform_4, window_bounds = array<i64: 16, 1>}, {pipeline_mode = #tpu.pipeline_mode<synchronous>, transform_indices = @transform_5, window_bounds = array<i64: 16, 1>}, {transform_indices = @transform_6, window_bounds = array<i64: 1, 16, 128>}, {pipeline_mode = #tpu.pipeline_mode<synchronous>, transform_indices = @transform_7, window_bounds = array<i64: 4, 16>}, {pipeline_mode = #tpu.pipeline_mode<synchronous>, transform_indices = @transform_8, window_bounds = array<i64: 16, 4>}, {transform_indices = @transform_9, window_bounds = array<i64: 1, 16, 256>}]} {
    %c0 = arith.constant 0 : index
    %c0_0 = arith.constant 0 : index
    %0 = vector.load %arg4[%c0, %c0_0] : memref<16x4xf32, #tpu.memory_space<vmem>>, vector<16x4xf32>
    %c0_1 = arith.constant 0 : index
    %c0_2 = arith.constant 0 : index
    %c0_3 = arith.constant 0 : index
    %1 = vector.load %arg2[%c0_1, %c0_2, %c0_3] : memref<1x4x256xf32, #tpu.memory_space<vmem>>, vector<1x4x256xf32>
    %2 = vector.shape_cast %1 : vector<1x4x256xf32> to vector<4x256xf32>
    %cst = arith.constant dense<0.000000e+00> : vector<16x256xf32>
    %3 = tpu.matmul %0, %2, %cst {dimension_numbers = #tpu.dot_dimension_numbers<[1], [0], [0], [1], [0, 0, 1, 1], [], []>} : vector<16x4xf32>, vector<4x256xf32>, vector<16x256xf32> -> vector<16x256xf32>
    %c0_4 = arith.constant 0 : index
    %c0_5 = arith.constant 0 : index
    %4 = vector.load %arg5[%c0_4, %c0_5] : memref<16x4xf32, #tpu.memory_space<vmem>>, vector<16x4xf32>
    %c0_6 = arith.constant 0 : index
    %c0_7 = arith.constant 0 : index
    %c0_8 = arith.constant 0 : index
    %5 = vector.load %arg3[%c0_6, %c0_7, %c0_8] : memref<1x4x256xf32, #tpu.memory_space<vmem>>, vector<1x4x256xf32>
    %6 = vector.shape_cast %5 : vector<1x4x256xf32> to vector<4x256xf32>
    %cst_9 = arith.constant dense<0.000000e+00> : vector<16x256xf32>
    %7 = tpu.matmul %4, %6, %cst_9 {dimension_numbers = #tpu.dot_dimension_numbers<[1], [0], [0], [1], [0, 0, 1, 1], [], []>} : vector<16x4xf32>, vector<4x256xf32>, vector<16x256xf32> -> vector<16x256xf32>
    %8 = arith.addf %3, %7 : vector<16x256xf32>
    %c0_10 = arith.constant 0 : index
    %c0_11 = arith.constant 0 : index
    %9 = vector.load %arg6[%c0_10, %c0_11] : memref<16x1xf32, #tpu.memory_space<vmem>>, vector<16x1xf32>
    %10 = vector.broadcast %9 : vector<16x1xf32> to vector<16x256xf32>
    %11 = arith.mulf %8, %10 : vector<16x256xf32>
    %c0_12 = arith.constant 0 : index
    %c0_13 = arith.constant 0 : index
    %12 = vector.load %arg7[%c0_12, %c0_13] : memref<16x1xf32, #tpu.memory_space<vmem>>, vector<16x1xf32>
    %13 = vector.broadcast %12 : vector<16x1xf32> to vector<16x256xf32>
    %14 = arith.addf %11, %13 : vector<16x256xf32>
    %cst_14 = arith.constant 0.000000e+00 : f32
    %15 = vector.broadcast %cst_14 : f32 to vector<16x256xf32>
    %16 = arith.maximumf %14, %15 : vector<16x256xf32>
    %c0_15 = arith.constant 0 : index
    %c0_16 = arith.constant 0 : index
    %17 = vector.load %arg9[%c0_15, %c0_16] : memref<4x16xf32, #tpu.memory_space<vmem>>, vector<4x16xf32>
    %c0_17 = arith.constant 0 : index
    %c0_18 = arith.constant 0 : index
    %c0_19 = arith.constant 0 : index
    %18 = vector.load %arg8[%c0_17, %c0_18, %c0_19] : memref<1x16x128xf32, #tpu.memory_space<vmem>>, vector<1x16x128xf32>
    %19 = vector.shape_cast %18 : vector<1x16x128xf32> to vector<16x128xf32>
    %cst_20 = arith.constant dense<0.000000e+00> : vector<4x128xf32>
    %20 = tpu.matmul %17, %19, %cst_20 {dimension_numbers = #tpu.dot_dimension_numbers<[1], [0], [0], [1], [0, 0, 1, 1], [], []>} : vector<4x16xf32>, vector<16x128xf32>, vector<4x128xf32> -> vector<4x128xf32>
    %cst_21 = arith.constant 0.000000e+00 : f32
    %21 = vector.broadcast %cst_21 : f32 to vector<4x128xf32>
    %22 = arith.maximumf %20, %21 : vector<4x128xf32>
    %c0_22 = arith.constant 0 : index
    %c0_23 = arith.constant 0 : index
    %23 = vector.load %arg10[%c0_22, %c0_23] : memref<16x4xf32, #tpu.memory_space<vmem>>, vector<16x4xf32>
    %cst_24 = arith.constant dense<0.000000e+00> : vector<16x128xf32>
    %24 = tpu.matmul %23, %22, %cst_24 {dimension_numbers = #tpu.dot_dimension_numbers<[1], [0], [0], [1], [0, 0, 1, 1], [], []>} : vector<16x4xf32>, vector<4x128xf32>, vector<16x128xf32> -> vector<16x128xf32>
    %cst_25 = arith.constant 0.000000e+00 : f32
    %25 = vector.broadcast %cst_25 : f32 to vector<16x128xf32>
    %26 = arith.subf %25, %24 : vector<16x128xf32>
    %27 = math.exp %26 : vector<16x128xf32>
    %cst_26 = arith.constant 1.000000e+00 : f32
    %28 = vector.broadcast %cst_26 : f32 to vector<16x128xf32>
    %29 = arith.addf %28, %27 : vector<16x128xf32>
    %cst_27 = arith.constant 1.000000e+00 : f32
    %30 = vector.broadcast %cst_27 : f32 to vector<16x128xf32>
    %31 = arith.divf %30, %29 : vector<16x128xf32>
    %cst_28 = arith.constant 1.000000e+00 : f32
    %32 = vector.broadcast %cst_28 : f32 to vector<16x128xf32>
    %33 = arith.addf %31, %32 : vector<16x128xf32>
    %34 = vector.extract_strided_slice %33 {offsets = [0, 0], sizes = [16, 1], strides = [1, 1]} : vector<16x128xf32> to vector<16x1xf32>
    %35 = vector.broadcast %34 : vector<16x1xf32> to vector<16x256xf32>
    %36 = arith.mulf %16, %35 : vector<16x256xf32>
    %c0_29 = arith.constant 0 : index
    %c0_30 = arith.constant 0 : index
    %c0_31 = arith.constant 0 : index
    %37 = vector.load %arg11[%c0_29, %c0_30, %c0_31] : memref<1x16x256xf32, #tpu.memory_space<vmem>>, vector<1x16x256xf32>
    %38 = vector.shape_cast %37 : vector<1x16x256xf32> to vector<16x256xf32>
    %39 = vector.shape_cast %36 : vector<16x256xf32> to vector<1x16x256xf32>
    tpu.vector_store %arg11[%c0_29, %c0_30, %c0_31], %39 {strides = array<i32>} : memref<1x16x256xf32, #tpu.memory_space<vmem>>, vector<1x16x256xf32>,
    return
  }
  func.func @transform_0(%arg0: i32, %arg1: i32) -> (i32, i32, i32) {
    %c0_i32 = arith.constant 0 : i32
    %c0_i32_0 = arith.constant 0 : i32
    return %arg0, %c0_i32, %arg1 : i32, i32, i32
  }
  func.func @transform_1(%arg0: i32, %arg1: i32) -> (i32, i32, i32) {
    %c0_i32 = arith.constant 0 : i32
    %c0_i32_0 = arith.constant 0 : i32
    return %arg0, %c0_i32, %arg1 : i32, i32, i32
  }
  func.func @transform_2(%arg0: i32, %arg1: i32) -> (i32, i32) {
    %c0_i32 = arith.constant 0 : i32
    %c0_i32_0 = arith.constant 0 : i32
    %c0_i32_1 = arith.constant 0 : i32
    return %c0_i32, %c0_i32_0 : i32, i32
  }
  func.func @transform_3(%arg0: i32, %arg1: i32) -> (i32, i32) {
    %c0_i32 = arith.constant 0 : i32
    %c0_i32_0 = arith.constant 0 : i32
    %c0_i32_1 = arith.constant 0 : i32
    return %c0_i32, %c0_i32_0 : i32, i32
  }
  func.func @transform_4(%arg0: i32, %arg1: i32) -> (i32, i32) {
    %c0_i32 = arith.constant 0 : i32
    %c0_i32_0 = arith.constant 0 : i32
    %c0_i32_1 = arith.constant 0 : i32
    return %c0_i32, %c0_i32_0 : i32, i32
  }
  func.func @transform_5(%arg0: i32, %arg1: i32) -> (i32, i32) {
    %c0_i32 = arith.constant 0 : i32
    %c0_i32_0 = arith.constant 0 : i32
    %c0_i32_1 = arith.constant 0 : i32
    return %c0_i32, %c0_i32_0 : i32, i32
  }
  func.func @transform_6(%arg0: i32, %arg1: i32) -> (i32, i32, i32) {
    %c0_i32 = arith.constant 0 : i32
    %c0_i32_0 = arith.constant 0 : i32
    %c0_i32_1 = arith.constant 0 : i32
    return %arg0, %c0_i32, %c0_i32_0 : i32, i32, i32
  }
  func.func @transform_7(%arg0: i32, %arg1: i32) -> (i32, i32) {
    %c0_i32 = arith.constant 0 : i32
    %c0_i32_0 = arith.constant 0 : i32
    %c0_i32_1 = arith.constant 0 : i32
    return %c0_i32, %c0_i32_0 : i32, i32
  }
  func.func @transform_8(%arg0: i32, %arg1: i32) -> (i32, i32) {
    %c0_i32 = arith.constant 0 : i32
    %c0_i32_0 = arith.constant 0 : i32
    %c0_i32_1 = arith.constant 0 : i32
    return %c0_i32, %c0_i32_0 : i32, i32
  }
  func.func @transform_9(%arg0: i32, %arg1: i32) -> (i32, i32, i32) {
    %c0_i32 = arith.constant 0 : i32
    %c0_i32_0 = arith.constant 0 : i32
    return %arg0, %c0_i32, %arg1 : i32, i32, i32
  }
}

</mosaic_0001>

<llo_original>
// kernel: _ffm_impl.2
$region0: #{_ffm_impl.2}
  #allocation0 [shape = 'u32[]', space=smem, size = 0x4, offset = 0x4, fixed_abs, tag = 'smem constant byte address 0x4 - core index']
  #allocation1 [shape = 'u32[144,128]{1,0:T(1,128)}', space=vmem, size = 0x12000, scoped, tag = 'internal scratch']
  %s0 = inlined_call_operand.vmem [shape: f32[2,4,256], index: 0, kind: input, shape index: {}]
  %s1 = inlined_call_operand.vmem [shape: f32[2,4,256], index: 1, kind: input, shape index: {}]
  %s2 = inlined_call_operand.vmem [shape: f32[16,4], index: 2, kind: input, shape index: {}]
  %s3 = inlined_call_operand.vmem [shape: f32[16,4], index: 3, kind: input, shape index: {}]
  %s4 = inlined_call_operand.vmem [shape: f32[16,1], index: 4, kind: input, shape index: {}]
  %s5 = inlined_call_operand.vmem [shape: f32[16,1], index: 5, kind: input, shape index: {}]
  %s6 = inlined_call_operand.vmem [shape: f32[2,1,16,1], index: 6, kind: output, shape index: {}]
  %s7 = sld [smem:[#allocation0]]
  $region57: #{_ffm_impl.2} parent=0
    _
  %s9 = ssub.s32 1, %s7
  %s10 = scalar_select 0, %s9, %s7
  loop: start=0, step=1, limit=4
  $region2: #{_ffm_impl.2} parent=0 // loop_pre_header
    _
  $region3: #{_ffm_impl.2} parent=0 // loop_header
    %s12 = sphi 0, %s16
    %p13 = scmp.ge.s32.totalorder %s12, 4
    %s19 = sphi 0, %s31
    %s20 = sphi 0, %s27
    %s21 = sphi 0, %s19
    %s22 = sphi 0, %s20
    %s23 = sphi 0, %s21
    %s24 = sphi 0, %s22
    %s36 = sphi 0, %s38
    %s39 = sphi 0, %s36
    %s40 = sphi 0, %s39
    %s56 = sphi 0, %s40
    %s64 = sphi 0, %s66
    %s67 = sphi 0, %s64
    %s68 = sphi 0, %s67
    %s84 = sphi 0, %s68
    %s88 = sphi 0, %s88
    %s90 = sphi 0, %s88
    %s91 = sphi 0, %s90
    %s105 = sphi 0, %s91
    %s109 = sphi 0, %s109
    %s111 = sphi 0, %s109
    %s112 = sphi 0, %s111
    %s126 = sphi 0, %s112
    %s130 = sphi 0, %s130
    %s132 = sphi 0, %s130
    %s133 = sphi 0, %s132
    %s147 = sphi 0, %s133
    %s151 = sphi 0, %s151
    %s153 = sphi 0, %s151
    %s154 = sphi 0, %s153
    %s168 = sphi 0, %s154
    %s176 = sphi 0, %s178
    %s179 = sphi 0, %s176
    %s180 = sphi 0, %s179
    %s196 = sphi 0, %s180
  $region4: #{_ffm_impl.2} parent=0 // loop_header_branch
    %15 = sbr.rel (%p13) target = $region8
  $region5: #{_ffm_impl.2} parent=0 // loop_body
    %s17 = ssub.s32 %s12, 1
    %s18 = ssub.s32 %s12, 2
    %s25 = sadd.s32 1, %s20
    %p26 = scmp.ge.s32.totalorder %s25, 1
    %s27 = scalar_select %p26, 0, %s25
    %s28 = sadd.s32 1, %s19
    %s29 = scalar_select %p26, %s28, %s19
    %p30 = scmp.ge.s32.totalorder %s29, 2
    %s31 = scalar_select %p30, 0, %s29
    %s32 = ssub.s32 %s19, %s31
    %s33 = ssub.s32 %s20, %s27
    %s34 = sor.u32 %s32, %s33
    %p35 = scmp.eq.s32.totalorder %s34, 0
    %s37 = sadd.s32 %s36, 1
    %s38 = scalar_select %p35, %s36, %s37
    %p41 = pneg %p35
    %p42 = scmp.eq.s32.totalorder %s12, 1
    %p43 = por %p41, %p42
    %p44 = scmp.ne.s32.totalorder %s36, %s39
    %p45 = scmp.eq.s32.totalorder %s12, 0
    %p46 = por %p44, %p45
    %p47 = scmp.ne.s32.totalorder %s36, %s39
    %p48 = scmp.eq.s32.totalorder %s17, 1
    %p49 = por %p47, %p48
    %p50 = scmp.ne.s32.totalorder %s39, %s40
    %p51 = scmp.eq.s32.totalorder %s17, 0
    %p52 = por %p50, %p51
    %p53 = scmp.ne.s32.totalorder %s39, %s40
    %p54 = scmp.eq.s32.totalorder %s18, 1
    %p55 = por %p53, %p54
    %p57 = scmp.ne.s32.totalorder %s40, %s56
    %p58 = scmp.eq.s32.totalorder %s18, 0
    %p59 = por %p57, %p58
    %s60 = ssub.s32 %s19, %s31
    %s61 = ssub.s32 %s20, %s27
    %s62 = sor.u32 %s60, %s61
    %p63 = scmp.eq.s32.totalorder %s62, 0
    %s65 = sadd.s32 %s64, 1
    %s66 = scalar_select %p63, %s64, %s65
    %p69 = pneg %p63
    %p70 = scmp.eq.s32.totalorder %s12, 1
    %p71 = por %p69, %p70
    %p72 = scmp.ne.s32.totalorder %s64, %s67
    %p73 = scmp.eq.s32.totalorder %s12, 0
    %p74 = por %p72, %p73
    %p75 = scmp.ne.s32.totalorder %s64, %s67
    %p76 = scmp.eq.s32.totalorder %s17, 1
    %p77 = por %p75, %p76
    %p78 = scmp.ne.s32.totalorder %s67, %s68
    %p79 = scmp.eq.s32.totalorder %s17, 0
    %p80 = por %p78, %p79
    %p81 = scmp.ne.s32.totalorder %s67, %s68
    %p82 = scmp.eq.s32.totalorder %s18, 1
    %p83 = por %p81, %p82
    %p85 = scmp.ne.s32.totalorder %s68, %s84
    %p86 = scmp.eq.s32.totalorder %s18, 0
    %p87 = por %p85, %p86
    %s89 = sadd.s32 %s88, 1
    %p92 = scmp.eq.s32.totalorder %s12, 1
    %p93 = scmp.ne.s32.totalorder %s88, %s90
    %p94 = scmp.eq.s32.totalorder %s12, 0
    %p95 = por %p93, %p94
    %p96 = scmp.ne.s32.totalorder %s88, %s90
    %p97 = scmp.eq.s32.totalorder %s17, 1
    %p98 = por %p96, %p97
    %p99 = scmp.ne.s32.totalorder %s90, %s91
    %p100 = scmp.eq.s32.totalorder %s17, 0
    %p101 = por %p99, %p100
    %p102 = scmp.ne.s32.totalorder %s90, %s91
    %p103 = scmp.eq.s32.totalorder %s18, 1
    %p104 = por %p102, %p103
    %p106 = scmp.ne.s32.totalorder %s91, %s105
    %p107 = scmp.eq.s32.totalorder %s18, 0
    %p108 = por %p106, %p107
    %s110 = sadd.s32 %s109, 1
    %p113 = scmp.eq.s32.totalorder %s12, 1
    %p114 = scmp.ne.s32.totalorder %s109, %s111
    %p115 = scmp.eq.s32.totalorder %s12, 0
    %p116 = por %p114, %p115
    %p117 = scmp.ne.s32.totalorder %s109, %s111
    %p118 = scmp.eq.s32.totalorder %s17, 1
    %p119 = por %p117, %p118
    %p120 = scmp.ne.s32.totalorder %s111, %s112
    %p121 = scmp.eq.s32.totalorder %s17, 0
    %p122 = por %p120, %p121
    %p123 = scmp.ne.s32.totalorder %s111, %s112
    %p124 = scmp.eq.s32.totalorder %s18, 1
    %p125 = por %p123, %p124
    %p127 = scmp.ne.s32.totalorder %s112, %s126
    %p128 = scmp.eq.s32.totalorder %s18, 0
    %p129 = por %p127, %p128
    %s131 = sadd.s32 %s130, 1
    %p134 = scmp.eq.s32.totalorder %s12, 1
    %p135 = scmp.ne.s32.totalorder %s130, %s132
    %p136 = scmp.eq.s32.totalorder %s12, 0
    %p137 = por %p135, %p136
    %p138 = scmp.ne.s32.totalorder %s130, %s132
    %p139 = scmp.eq.s32.totalorder %s17, 1
    %p140 = por %p138, %p139
    %p141 = scmp.ne.s32.totalorder %s132, %s133
    %p142 = scmp.eq.s32.totalorder %s17, 0
    %p143 = por %p141, %p142
    %p144 = scmp.ne.s32.totalorder %s132, %s133
    %p145 = scmp.eq.s32.totalorder %s18, 1
    %p146 = por %p144, %p145
    %p148 = scmp.ne.s32.totalorder %s133, %s147
    %p149 = scmp.eq.s32.totalorder %s18, 0
    %p150 = por %p148, %p149
    %s152 = sadd.s32 %s151, 1
    %p155 = scmp.eq.s32.totalorder %s12, 1
    %p156 = scmp.ne.s32.totalorder %s151, %s153
    %p157 = scmp.eq.s32.totalorder %s12, 0
    %p158 = por %p156, %p157
    %p159 = scmp.ne.s32.totalorder %s151, %s153
    %p160 = scmp.eq.s32.totalorder %s17, 1
    %p161 = por %p159, %p160
    %p162 = scmp.ne.s32.totalorder %s153, %s154
    %p163 = scmp.eq.s32.totalorder %s17, 0
    %p164 = por %p162, %p163
    %p165 = scmp.ne.s32.totalorder %s153, %s154
    %p166 = scmp.eq.s32.totalorder %s18, 1
    %p167 = por %p165, %p166
    %p169 = scmp.ne.s32.totalorder %s154, %s168
    %p170 = scmp.eq.s32.totalorder %s18, 0
    %p171 = por %p169, %p170
    %s172 = ssub.s32 %s19, %s31
    %s173 = ssub.s32 %s20, %s27
    %s174 = sor.u32 %s172, %s173
    %p175 = scmp.eq.s32.totalorder %s174, 0
    %s177 = sadd.s32 %s176, 1
    %s178 = scalar_select %p175, %s176, %s177
    %p181 = pneg %p175
    %p182 = scmp.eq.s32.totalorder %s12, 1
    %p183 = por %p181, %p182
    %p184 = scmp.ne.s32.totalorder %s176, %s179
    %p185 = scmp.eq.s32.totalorder %s12, 0
    %p186 = por %p184, %p185
    %p187 = scmp.ne.s32.totalorder %s176, %s179
    %p188 = scmp.eq.s32.totalorder %s17, 1
    %p189 = por %p187, %p188
    %p190 = scmp.ne.s32.totalorder %s179, %s180
    %p191 = scmp.eq.s32.totalorder %s17, 0
    %p192 = por %p190, %p191
    %p193 = scmp.ne.s32.totalorder %s179, %s180
    %p194 = scmp.eq.s32.totalorder %s18, 1
    %p195 = por %p193, %p194
    %p197 = scmp.ne.s32.totalorder %s180, %s196
    %p198 = scmp.eq.s32.totalorder %s18, 0
    %p199 = por %p197, %p198
    %p200 = scmp.le.s32.totalorder 1, %s12
    %p201 = scmp.lt.s32.totalorder %s12, 3
    %p202 = pnand %p200, %p201
    %p203 = pneg %p202
    // Predicated region
    $region9: #{_ffm_impl.2} parent=5 // pred_check
      _
    $region10: #{_ffm_impl.2} parent=5 // pred_check_branch
      %205 = sbr.rel (%p202) target = $region12
    $region11: #{_ffm_impl.2} parent=5 // pred_region
      %s206 = ssub.s32 %s12, 1
      // Predicated region
      $region13: #{_ffm_impl.2} parent=11 // pred_check
        %p207 = pneg %p101
      $region14: #{_ffm_impl.2} parent=11 // pred_check_branch
        %209 = sbr.rel (%p207) target = $region16
      $region15: #{_ffm_impl.2} parent=11 // pred_region
        _
      $region16: #{_ffm_impl.2} parent=11 // pred_fallthru
        _
      // Predicated region
      $region17: #{_ffm_impl.2} parent=11 // pred_check
        %p210 = pneg %p122
      $region18: #{_ffm_impl.2} parent=11 // pred_check_branch
        %212 = sbr.rel (%p210) target = $region20
      $region19: #{_ffm_impl.2} parent=11 // pred_region
        _
      $region20: #{_ffm_impl.2} parent=11 // pred_fallthru
        _
      // Predicated region
      $region21: #{_ffm_impl.2} parent=11 // pred_check
        %p213 = pneg %p143
      $region22: #{_ffm_impl.2} parent=11 // pred_check_branch
        %215 = sbr.rel (%p213) target = $region24
      $region23: #{_ffm_impl.2} parent=11 // pred_region
        _
      $region24: #{_ffm_impl.2} parent=11 // pred_fallthru
        _
      // Predicated region
      $region25: #{_ffm_impl.2} parent=11 // pred_check
        %p216 = pneg %p164
      $region26: #{_ffm_impl.2} parent=11 // pred_check_branch
        %218 = sbr.rel (%p216) target = $region28
      $region27: #{_ffm_impl.2} parent=11 // pred_region
        _
      $region28: #{_ffm_impl.2} parent=11 // pred_fallthru
        _
    $region12: #{_ffm_impl.2} parent=5 // pred_fallthru
      _
    %p219 = scmp.lt.s32.totalorder %s12, 2
    // Predicated region
    $region29: #{_ffm_impl.2} parent=5 // pred_check
      %p220 = pneg %p219
    $region30: #{_ffm_impl.2} parent=5 // pred_check_branch
      %222 = sbr.rel (%p220) target = $region32
    $region31: #{_ffm_impl.2} parent=5 // pred_region
      // Predicated region
      $region33: #{_ffm_impl.2} parent=31 // pred_check
        %p223 = pneg %p46
      $region34: #{_ffm_impl.2} parent=31 // pred_check_branch
        %225 = sbr.rel (%p223) target = $region36
      $region35: #{_ffm_impl.2} parent=31 // pred_region
        %s226 = smul.u32 2, %s20
        %p227 = scmp.lt.s32.totalorder %s19, 1
        %s228 = scalar_select %p227, %s19, 1
        %p229 = scmp.lt.s32.totalorder %s226, 1
        %s230 = scalar_select %p229, %s226, 1
        %s231 = smul.addr %s228, 2
        %s232 = sadd.s32 %s230, %s231
        %s233 = smul.addr %s232, 4
        %s234 = scalar_lea.vmem %s0, %s233
        %s235 = smul.u32 2, %s20
      $region36: #{_ffm_impl.2} parent=31 // pred_fallthru
        _
      // Predicated region
      $region37: #{_ffm_impl.2} parent=31 // pred_check
        %p236 = pneg %p74
      $region38: #{_ffm_impl.2} parent=31 // pred_check_branch
        %238 = sbr.rel (%p236) target = $region40
      $region39: #{_ffm_impl.2} parent=31 // pred_region
        %s239 = smul.u32 2, %s20
        %p240 = scmp.lt.s32.totalorder %s19, 1
        %s241 = scalar_select %p240, %s19, 1
        %p242 = scmp.lt.s32.totalorder %s239, 1
        %s243 = scalar_select %p242, %s239, 1
        %s244 = smul.addr %s241, 2
        %s245 = sadd.s32 %s243, %s244
        %s246 = smul.addr %s245, 4
        %s247 = scalar_lea.vmem %s1, %s246
        %s248 = smul.u32 2, %s20
      $region40: #{_ffm_impl.2} parent=31 // pred_fallthru
        _
    $region32: #{_ffm_impl.2} parent=5 // pred_fallthru
      _
    %p249 = scmp.le.s32.totalorder 1, %s12
    %p250 = scmp.lt.s32.totalorder %s12, 3
    %p251 = pnand %p249, %p250
    %p252 = pneg %p251
    // Predicated region
    $region41: #{_ffm_impl.2} parent=5 // pred_check
      _
    $region42: #{_ffm_impl.2} parent=5 // pred_check_branch
      %254 = sbr.rel (%p251) target = $region44
    $region43: #{_ffm_impl.2} parent=5 // pred_region
      %s255 = ssub.s32 %s12, 1
      %s256 = smul.u32 2, %s22
      %p257 = scmp.lt.s32.totalorder %s21, 1
      %s258 = scalar_select %p257, %s21, 1
      %p259 = scmp.lt.s32.totalorder %s256, 1
      %s260 = scalar_select %p259, %s256, 1
      %s261 = smul.addr %s258, 2
      %s262 = sadd.s32 %s260, %s261
      %s263 = smul.addr %s262, 4
      %s264 = scalar_lea.vmem %s0, %s263
      %p265 = pneg %p52
      %p266 = pneg %p49
      %s267 = smul.u32 2, %s22
      %p268 = scmp.lt.s32.totalorder %s21, 1
      %s269 = scalar_select %p268, %s21, 1
      %p270 = scmp.lt.s32.totalorder %s267, 1
      %s271 = scalar_select %p270, %s267, 1
      %s272 = smul.addr %s269, 2
      %s273 = sadd.s32 %s271, %s272
      %s274 = smul.addr %s273, 4
      %s275 = scalar_lea.vmem %s1, %s274
      %p276 = pneg %p80
      %p277 = pneg %p77
      %p278 = pneg %p101
      %p279 = pneg %p98
      %p280 = pneg %p122
      %p281 = pneg %p119
      %p282 = pneg %p143
      %p283 = pneg %p140
      %p284 = pneg %p164
      %p285 = pneg %p161
      %p286 = pneg %p192
      %p287 = pneg %p189
      %p288 = scmp.lt.s32.totalorder %s21, 1
      %s289 = scalar_select %p288, %s21, 1
      %p290 = scmp.lt.s32.totalorder %s22, 0
      %s291 = scalar_select %p290, %s22, 0
      %s292 = smul.addr %s291, 2
      %s293 = smul.addr %s289, 2
      %s294 = sadd.s32 %s292, %s293
      %s295 = smul.addr %s294, 8
      %s296 = scalar_lea.vmem %s6, %s295
      %s297 = smul.u32 2, %s22
      %p298 = scmp.lt.s32.totalorder %s21, 1
      %s299 = scalar_select %p298, %s21, 1
      %p300 = scmp.lt.s32.totalorder %s297, 1
      %s301 = scalar_select %p300, %s297, 1
      %s302 = smul.addr %s299, 2
      %s303 = sadd.s32 %s301, %s302
      %s304 = smul.addr %s303, 4
      %s305 = scalar_lea.vmem %s0, %s304
      %s306 = smul.u32 2, %s22
      %s307 = smul.u32 2, %s22
      %p308 = scmp.lt.s32.totalorder %s21, 1
      %s309 = scalar_select %p308, %s21, 1
      %p310 = scmp.lt.s32.totalorder %s307, 1
      %s311 = scalar_select %p310, %s307, 1
      %s312 = smul.addr %s309, 2
      %s313 = sadd.s32 %s311, %s312
      %s314 = smul.addr %s313, 4
      %s315 = scalar_lea.vmem %s1, %s314
      %s316 = smul.u32 2, %s22
      %p317 = scmp.lt.s32.totalorder %s21, 1
      %s318 = scalar_select %p317, %s21, 1
      %p319 = scmp.lt.s32.totalorder %s22, 0
      %s320 = scalar_select %p319, %s22, 0
      %s321 = smul.addr %s320, 2
      %s322 = smul.addr %s318, 2
      %s323 = sadd.s32 %s321, %s322
      %s324 = smul.addr %s323, 8
      %s325 = scalar_lea.vmem %s6, %s324
      %v326 = vld [vmem:[%s2] sm:$0xff]
      %v327 = vld [vmem:[%s2 + $0x8] sm:$0xff]
      %v328 = vld [vmem:[%s305] sm:$0xff]
      %v329 = vld [vmem:[%s3] sm:$0xff]
      %v330 = vld [vmem:[%s3 + $0x8] sm:$0xff]
      %v331 = vld [vmem:[%s315] sm:$0xff]
      %v333 = vcombine.high %v331, %v331
      %vm334 = vcmask 31744
      %v336 = vsel %vm334, %v329, 0
      %v339 = vsel %vm334, %v330, 0
      %vm341 = vcmask 1043456
      %v342 = vsel %vm341, %v331, 0
      %v344 = vsel %vm341, %v333, 0
      %346 = vmatprep.subr.mxu0 0.0
      %347 = vmatpush1.msra.mxu0 0.0
      %348 = vmatprep.subr.mxu0 0.0
      %349 = vmatpush1.msra.mxu0 0.0
      %350 = vmatprep.subr.mxu0 0.0
      %351 = vmatpush1.msra.mxu0 0.0
      %352 = vmatprep.subr.mxu0 0.0
      %353 = vmatpush1.msra.mxu0 0.0
      %354 = vmatprep.subr.mxu0 0.0
      %355 = vmatpush1.msra.mxu0 0.0
      %356 = vmatprep.subr.mxu0 0.0
      %357 = vmatpush1.msra.mxu0 0.0
      %358 = vmatprep.subr.mxu0 0.0
      %359 = vmatpush1.msra.mxu0 0.0
      %360 = vmatprep.subr.mxu0 0.0
      %361 = vmatpush1.msra.mxu0 0.0
      %362 = vmatprep.subr.mxu0 0.0
      %363 = vmatpush1.msra.mxu0 0.0
      %364 = vmatprep.subr.mxu0 0.0
      %365 = vmatpush1.msra.mxu0 0.0
      %366 = vmatprep.subr.mxu0 0.0
      %367 = vmatpush1.msra.mxu0 0.0
      %368 = vmatprep.subr.mxu0 0.0
      %369 = vmatpush1.msra.mxu0 0.0
      %370 = vmatprep.subr.mxu0 0.0
      %371 = vmatpush1.msra.mxu0 0.0
      %372 = vmatprep.subr.mxu0 0.0
      %373 = vmatpush1.msra.mxu0 0.0
      %374 = vmatprep.subr.mxu0 0.0
      %375 = vmatpush1.msra.mxu0 0.0
      %376 = vmatprep.subr.mxu0 %v344
      %377 = vmatpush1.msra.mxu0 %v342
      %378 = vmatprep.subr.mxu0 0.0
      %379 = vmatpush2.msra.mxu0 0.0
      %380 = vmatprep.subr.mxu0 0.0
      %381 = vmatpush2.msra.mxu0 0.0
      %382 = vmatprep.subr.mxu0 0.0
      %383 = vmatpush2.msra.mxu0 0.0
      %384 = vmatprep.subr.mxu0 0.0
      %385 = vmatpush2.msra.mxu0 0.0
      %386 = vmatprep.subr.mxu0 0.0
      %387 = vmatpush2.msra.mxu0 0.0
      %388 = vmatprep.subr.mxu0 0.0
      %389 = vmatpush2.msra.mxu0 0.0
      %390 = vmatprep.subr.mxu0 0.0
      %391 = vmatpush2.msra.mxu0 0.0
      %392 = vmatprep.subr.mxu0 0.0
      %393 = vmatpush2.msra.mxu0 0.0
      %394 = vmatprep.subr.mxu0 0.0
      %395 = vmatpush2.msra.mxu0 0.0
      %396 = vmatprep.subr.mxu0 0.0
      %397 = vmatpush2.msra.mxu0 0.0
      %398 = vmatprep.subr.mxu0 0.0
      %399 = vmatpush2.msra.mxu0 0.0
      %400 = vmatprep.subr.mxu0 0.0
      %401 = vmatpush2.msra.mxu0 0.0
      %402 = vmatprep.subr.mxu0 0.0
      %403 = vmatpush2.msra.mxu0 0.0
      %404 = vmatprep.subr.mxu0 0.0
      %405 = vmatpush2.msra.mxu0 0.0
      %406 = vmatprep.subr.mxu0 0.0
      %407 = vmatpush2.msra.mxu0 0.0
      %408 = vmatprep.subr.mxu0 0.0
      %409 = vmatpush2.msra.mxu0 0.0
      %410 = vmatprep.mubr.f32.mxu0 0.0
      %411 = vmatmul.mubr.f32.gmra.mxu0 %v336
      %v412 = vpop.f32.mrf.mxu0
      %v413 = vadd.f32 0.0, %v412
      %v414 = vpop.f32.mrf.mxu0
      %v415 = vadd.f32 0.0, %v414
      %416 = vmatprep.mubr.f32.mxu0 0.0
      %417 = vmatmul.mubr.f32.gmra.mxu0 %v339
      %v418 = vpop.f32.mrf.mxu0
      %v419 = vadd.f32 0.0, %v418
      %v420 = vpop.f32.mrf.mxu0
      %v421 = vadd.f32 0.0, %v420
      %422 = vdwg.mxu0
      %v424 = vcombine.high %v328, %v328
      %v426 = vsel %vm334, %v326, 0
      %v429 = vsel %vm334, %v327, 0
      %v431 = vsel %vm341, %v328, 0
      %v433 = vsel %vm341, %v424, 0
      %435 = vmatprep.subr.mxu0 0.0
      %436 = vmatpush1.msra.mxu0 0.0
      %437 = vmatprep.subr.mxu0 0.0
      %438 = vmatpush1.msra.mxu0 0.0
      %439 = vmatprep.subr.mxu0 0.0
      %440 = vmatpush1.msra.mxu0 0.0
      %441 = vmatprep.subr.mxu0 0.0
      %442 = vmatpush1.msra.mxu0 0.0
      %443 = vmatprep.subr.mxu0 0.0
      %444 = vmatpush1.msra.mxu0 0.0
      %445 = vmatprep.subr.mxu0 0.0
      %446 = vmatpush1.msra.mxu0 0.0
      %447 = vmatprep.subr.mxu0 0.0
      %448 = vmatpush1.msra.mxu0 0.0
      %449 = vmatprep.subr.mxu0 0.0
      %450 = vmatpush1.msra.mxu0 0.0
      %451 = vmatprep.subr.mxu0 0.0
      %452 = vmatpush1.msra.mxu0 0.0
      %453 = vmatprep.subr.mxu0 0.0
      %454 = vmatpush1.msra.mxu0 0.0
      %455 = vmatprep.subr.mxu0 0.0
      %456 = vmatpush1.msra.mxu0 0.0
      %457 = vmatprep.subr.mxu0 0.0
      %458 = vmatpush1.msra.mxu0 0.0
      %459 = vmatprep.subr.mxu0 0.0
      %460 = vmatpush1.msra.mxu0 0.0
      %461 = vmatprep.subr.mxu0 0.0
      %462 = vmatpush1.msra.mxu0 0.0
      %463 = vmatprep.subr.mxu0 0.0
      %464 = vmatpush1.msra.mxu0 0.0
      %465 = vmatprep.subr.mxu0 %v433
      %466 = vmatpush1.msra.mxu0 %v431
      %467 = vmatprep.subr.mxu0 0.0
      %468 = vmatpush2.msra.mxu0 0.0
      %469 = vmatprep.subr.mxu0 0.0
      %470 = vmatpush2.msra.mxu0 0.0
      %471 = vmatprep.subr.mxu0 0.0
      %472 = vmatpush2.msra.mxu0 0.0
      %473 = vmatprep.subr.mxu0 0.0
      %474 = vmatpush2.msra.mxu0 0.0
      %475 = vmatprep.subr.mxu0 0.0
      %476 = vmatpush2.msra.mxu0 0.0
      %477 = vmatprep.subr.mxu0 0.0
      %478 = vmatpush2.msra.mxu0 0.0
      %479 = vmatprep.subr.mxu0 0.0
      %480 = vmatpush2.msra.mxu0 0.0
      %481 = vmatprep.subr.mxu0 0.0
      %482 = vmatpush2.msra.mxu0 0.0
      %483 = vmatprep.subr.mxu0 0.0
      %484 = vmatpush2.msra.mxu0 0.0
      %485 = vmatprep.subr.mxu0 0.0
      %486 = vmatpush2.msra.mxu0 0.0
      %487 = vmatprep.subr.mxu0 0.0
      %488 = vmatpush2.msra.mxu0 0.0
      %489 = vmatprep.subr.mxu0 0.0
      %490 = vmatpush2.msra.mxu0 0.0
      %491 = vmatprep.subr.mxu0 0.0
      %492 = vmatpush2.msra.mxu0 0.0
      %493 = vmatprep.subr.mxu0 0.0
      %494 = vmatpush2.msra.mxu0 0.0
      %495 = vmatprep.subr.mxu0 0.0
      %496 = vmatpush2.msra.mxu0 0.0
      %497 = vmatprep.subr.mxu0 0.0
      %498 = vmatpush2.msra.mxu0 0.0
      %499 = vmatprep.mubr.f32.mxu0 0.0
      %500 = vmatmul.mubr.f32.gmra.mxu0 %v426
      %v501 = vpop.f32.mrf.mxu0
      %v502 = vadd.f32 %v413, %v501
      %v503 = vpop.f32.mrf.mxu0
      %v504 = vadd.f32 %v415, %v503
      %505 = vmatprep.mubr.f32.mxu0 0.0
      %506 = vmatmul.mubr.f32.gmra.mxu0 %v429
      %v507 = vpop.f32.mrf.mxu0
      %v508 = vadd.f32 %v419, %v507
      %v509 = vpop.f32.mrf.mxu0
      %v510 = vadd.f32 %v421, %v509
      %511 = vdwg.mxu0
      %v512 = vld [vmem:[%s4] sm:$0xff]
      %v513 = vld [vmem:[%s4 + $0x8] sm:$0xff]
      %515 = vset.pattern.permute.xlu0 0
      %516 = vperm.xlu0 %515, %v512
      %v517 = vpop.permute.xlu0 %516
      %520 = vset.pattern.permute.xlu0 0
      %521 = vperm.xlu0 %520, %v513
      %v522 = vpop.permute.xlu0 %521
      %v524 = vmul.f32 %v502, %v517
      %v525 = vmul.f32 %v504, %v517
      %v526 = vmul.f32 %v508, %v522
      %v527 = vmul.f32 %v510, %v522
      %v528 = vld [vmem:[%s5] sm:$0xff]
      %v529 = vld [vmem:[%s5 + $0x8] sm:$0xff]
      %531 = vset.pattern.permute.xlu0 0
      %532 = vperm.xlu0 %531, %v528
      %v533 = vpop.permute.xlu0 %532
      %536 = vset.pattern.permute.xlu0 0
      %537 = vperm.xlu0 %536, %v529
      %v538 = vpop.permute.xlu0 %537
      %v540 = vadd.f32 %v524, %v533
      %v541 = vadd.f32 %v525, %v533
      %v542 = vadd.f32 %v526, %v538
      %v543 = vadd.f32 %v527, %v538
      %v544 = vmax.f32 %v540, 0.0
      %v545 = vmax.f32 %v541, 0.0
      %v546 = vmax.f32 %v542, 0.0
      %v547 = vmax.f32 %v543, 0.0
      %v548 = vadd.f32 %v544, %v545
      %549 = vadd.xlane.f32.xlu0 %v548
      %v550 = vpop.xlane.xlu0 %549
      %v551 = vadd.f32 %v546, %v547
      %552 = vadd.xlane.f32.xlu0 %v551
      %v553 = vpop.xlane.xlu0 %552
      %vm554 = vcmask 7168
      %555 = vst.msk [vmem:[%s325] sm:$0xff] %vm554, %v550
      %556 = vst.msk [vmem:[%s325 + $0x8] sm:$0xff] %vm554, %v553
      %p557 = scmp.lt.s32.totalorder %s21, 1
      %s558 = scalar_select %p557, %s21, 1
      %p559 = scmp.lt.s32.totalorder %s22, 0
      %s560 = scalar_select %p559, %s22, 0
      %s561 = smul.addr %s560, 2
      %s562 = smul.addr %s558, 2
      %s563 = sadd.s32 %s561, %s562
      %s564 = smul.addr %s563, 8
      %s565 = scalar_lea.vmem %s6, %s564
      // Predicated region
      $region45: #{_ffm_impl.2} parent=43 // pred_check
        %p566 = pneg %p189
      $region46: #{_ffm_impl.2} parent=43 // pred_check_branch
        %568 = sbr.rel (%p566) target = $region48
      $region47: #{_ffm_impl.2} parent=43 // pred_region
        _
      $region48: #{_ffm_impl.2} parent=43 // pred_fallthru
        _
    $region44: #{_ffm_impl.2} parent=5 // pred_fallthru
      _
    %p569 = scmp.le.s32.totalorder 2, %s12
    // Predicated region
    $region49: #{_ffm_impl.2} parent=5 // pred_check
      %p570 = pneg %p569
    $region50: #{_ffm_impl.2} parent=5 // pred_check_branch
      %572 = sbr.rel (%p570) target = $region52
    $region51: #{_ffm_impl.2} parent=5 // pred_region
      %s573 = ssub.s32 %s12, 2
      // Predicated region
      $region53: #{_ffm_impl.2} parent=51 // pred_check
        %p574 = pneg %p195
      $region54: #{_ffm_impl.2} parent=51 // pred_check_branch
        %576 = sbr.rel (%p574) target = $region56
      $region55: #{_ffm_impl.2} parent=51 // pred_region
        %p577 = scmp.lt.s32.totalorder %s23, 1
        %s578 = scalar_select %p577, %s23, 1
        %p579 = scmp.lt.s32.totalorder %s24, 0
        %s580 = scalar_select %p579, %s24, 0
        %s581 = smul.addr %s580, 2
        %s582 = smul.addr %s578, 2
        %s583 = sadd.s32 %s581, %s582
        %s584 = smul.addr %s583, 8
        %s585 = scalar_lea.vmem %s6, %s584
      $region56: #{_ffm_impl.2} parent=51 // pred_fallthru
        _
    $region52: #{_ffm_impl.2} parent=5 // pred_fallthru
      _
  $region6: #{_ffm_impl.2} parent=0 // loop_footer
    %s16 = sadd.s32 1, %s12
  $region7: #{_ffm_impl.2} parent=0 // loop_footer_branch
    %11 = sbr.rel target = $region3
  $region8: #{_ffm_impl.2} parent=0 // loop_exit
    _

// kernel: _ffm_impl.3
$region0: #{_ffm_impl.3}
  #allocation0 [shape = 'u32[]', space=smem, size = 0x4, offset = 0x4, fixed_abs, tag = 'smem constant byte address 0x4 - core index']
  #allocation1 [shape = 'u32[144,128]{1,0:T(1,128)}', space=vmem, size = 0x12000, scoped, tag = 'internal scratch']
  %s0 = inlined_call_operand.vmem [shape: f32[2,4,256], index: 0, kind: input, shape index: {}]
  %s1 = inlined_call_operand.vmem [shape: f32[2,4,256], index: 1, kind: input, shape index: {}]
  %s2 = inlined_call_operand.vmem [shape: f32[16,4], index: 2, kind: input, shape index: {}]
  %s3 = inlined_call_operand.vmem [shape: f32[16,4], index: 3, kind: input, shape index: {}]
  %s4 = inlined_call_operand.vmem [shape: f32[16,1], index: 4, kind: input, shape index: {}]
  %s5 = inlined_call_operand.vmem [shape: f32[16,1], index: 5, kind: input, shape index: {}]
  %s6 = inlined_call_operand.vmem [shape: f32[2,16,128], index: 6, kind: input, shape index: {}]
  %s7 = inlined_call_operand.vmem [shape: f32[4,16], index: 7, kind: input, shape index: {}]
  %s8 = inlined_call_operand.vmem [shape: f32[16,4], index: 8, kind: input, shape index: {}]
  %s9 = inlined_call_operand.vmem [shape: f32[2,16,256], index: 9, kind: output, shape index: {}]
  %s10 = sld [smem:[#allocation0]]
  $region69: #{_ffm_impl.3} parent=0
    _
  %s12 = ssub.s32 1, %s10
  %s13 = scalar_select 0, %s12, %s10
  loop: start=0, step=1, limit=4
  $region2: #{_ffm_impl.3} parent=0 // loop_pre_header
    _
  $region3: #{_ffm_impl.3} parent=0 // loop_header
    %s15 = sphi 0, %s19
    %p16 = scmp.ge.s32.totalorder %s15, 4
    %s22 = sphi 0, %s34
    %s23 = sphi 0, %s30
    %s24 = sphi 0, %s22
    %s25 = sphi 0, %s23
    %s26 = sphi 0, %s24
    %s27 = sphi 0, %s25
    %s39 = sphi 0, %s41
    %s42 = sphi 0, %s39
    %s43 = sphi 0, %s42
    %s59 = sphi 0, %s43
    %s67 = sphi 0, %s69
    %s70 = sphi 0, %s67
    %s71 = sphi 0, %s70
    %s87 = sphi 0, %s71
    %s91 = sphi 0, %s91
    %s93 = sphi 0, %s91
    %s94 = sphi 0, %s93
    %s108 = sphi 0, %s94
    %s112 = sphi 0, %s112
    %s114 = sphi 0, %s112
    %s115 = sphi 0, %s114
    %s129 = sphi 0, %s115
    %s133 = sphi 0, %s133
    %s135 = sphi 0, %s133
    %s136 = sphi 0, %s135
    %s150 = sphi 0, %s136
    %s154 = sphi 0, %s154
    %s156 = sphi 0, %s154
    %s157 = sphi 0, %s156
    %s171 = sphi 0, %s157
    %s177 = sphi 0, %s179
    %s180 = sphi 0, %s177
    %s181 = sphi 0, %s180
    %s197 = sphi 0, %s181
    %s201 = sphi 0, %s201
    %s203 = sphi 0, %s201
    %s204 = sphi 0, %s203
    %s218 = sphi 0, %s204
    %s222 = sphi 0, %s222
    %s224 = sphi 0, %s222
    %s225 = sphi 0, %s224
    %s239 = sphi 0, %s225
    %s247 = sphi 0, %s249
    %s250 = sphi 0, %s247
    %s251 = sphi 0, %s250
    %s267 = sphi 0, %s251
  $region4: #{_ffm_impl.3} parent=0 // loop_header_branch
    %18 = sbr.rel (%p16) target = $region8
  $region5: #{_ffm_impl.3} parent=0 // loop_body
    %s20 = ssub.s32 %s15, 1
    %s21 = ssub.s32 %s15, 2
    %s28 = sadd.s32 1, %s23
    %p29 = scmp.ge.s32.totalorder %s28, 1
    %s30 = scalar_select %p29, 0, %s28
    %s31 = sadd.s32 1, %s22
    %s32 = scalar_select %p29, %s31, %s22
    %p33 = scmp.ge.s32.totalorder %s32, 2
    %s34 = scalar_select %p33, 0, %s32
    %s35 = ssub.s32 %s22, %s34
    %s36 = ssub.s32 %s23, %s30
    %s37 = sor.u32 %s35, %s36
    %p38 = scmp.eq.s32.totalorder %s37, 0
    %s40 = sadd.s32 %s39, 1
    %s41 = scalar_select %p38, %s39, %s40
    %p44 = pneg %p38
    %p45 = scmp.eq.s32.totalorder %s15, 1
    %p46 = por %p44, %p45
    %p47 = scmp.ne.s32.totalorder %s39, %s42
    %p48 = scmp.eq.s32.totalorder %s15, 0
    %p49 = por %p47, %p48
    %p50 = scmp.ne.s32.totalorder %s39, %s42
    %p51 = scmp.eq.s32.totalorder %s20, 1
    %p52 = por %p50, %p51
    %p53 = scmp.ne.s32.totalorder %s42, %s43
    %p54 = scmp.eq.s32.totalorder %s20, 0
    %p55 = por %p53, %p54
    %p56 = scmp.ne.s32.totalorder %s42, %s43
    %p57 = scmp.eq.s32.totalorder %s21, 1
    %p58 = por %p56, %p57
    %p60 = scmp.ne.s32.totalorder %s43, %s59
    %p61 = scmp.eq.s32.totalorder %s21, 0
    %p62 = por %p60, %p61
    %s63 = ssub.s32 %s22, %s34
    %s64 = ssub.s32 %s23, %s30
    %s65 = sor.u32 %s63, %s64
    %p66 = scmp.eq.s32.totalorder %s65, 0
    %s68 = sadd.s32 %s67, 1
    %s69 = scalar_select %p66, %s67, %s68
    %p72 = pneg %p66
    %p73 = scmp.eq.s32.totalorder %s15, 1
    %p74 = por %p72, %p73
    %p75 = scmp.ne.s32.totalorder %s67, %s70
    %p76 = scmp.eq.s32.totalorder %s15, 0
    %p77 = por %p75, %p76
    %p78 = scmp.ne.s32.totalorder %s67, %s70
    %p79 = scmp.eq.s32.totalorder %s20, 1
    %p80 = por %p78, %p79
    %p81 = scmp.ne.s32.totalorder %s70, %s71
    %p82 = scmp.eq.s32.totalorder %s20, 0
    %p83 = por %p81, %p82
    %p84 = scmp.ne.s32.totalorder %s70, %s71
    %p85 = scmp.eq.s32.totalorder %s21, 1
    %p86 = por %p84, %p85
    %p88 = scmp.ne.s32.totalorder %s71, %s87
    %p89 = scmp.eq.s32.totalorder %s21, 0
    %p90 = por %p88, %p89
    %s92 = sadd.s32 %s91, 1
    %p95 = scmp.eq.s32.totalorder %s15, 1
    %p96 = scmp.ne.s32.totalorder %s91, %s93
    %p97 = scmp.eq.s32.totalorder %s15, 0
    %p98 = por %p96, %p97
    %p99 = scmp.ne.s32.totalorder %s91, %s93
    %p100 = scmp.eq.s32.totalorder %s20, 1
    %p101 = por %p99, %p100
    %p102 = scmp.ne.s32.totalorder %s93, %s94
    %p103 = scmp.eq.s32.totalorder %s20, 0
    %p104 = por %p102, %p103
    %p105 = scmp.ne.s32.totalorder %s93, %s94
    %p106 = scmp.eq.s32.totalorder %s21, 1
    %p107 = por %p105, %p106
    %p109 = scmp.ne.s32.totalorder %s94, %s108
    %p110 = scmp.eq.s32.totalorder %s21, 0
    %p111 = por %p109, %p110
    %s113 = sadd.s32 %s112, 1
    %p116 = scmp.eq.s32.totalorder %s15, 1
    %p117 = scmp.ne.s32.totalorder %s112, %s114
    %p118 = scmp.eq.s32.totalorder %s15, 0
    %p119 = por %p117, %p118
    %p120 = scmp.ne.s32.totalorder %s112, %s114
    %p121 = scmp.eq.s32.totalorder %s20, 1
    %p122 = por %p120, %p121
    %p123 = scmp.ne.s32.totalorder %s114, %s115
    %p124 = scmp.eq.s32.totalorder %s20, 0
    %p125 = por %p123, %p124
    %p126 = scmp.ne.s32.totalorder %s114, %s115
    %p127 = scmp.eq.s32.totalorder %s21, 1
    %p128 = por %p126, %p127
    %p130 = scmp.ne.s32.totalorder %s115, %s129
    %p131 = scmp.eq.s32.totalorder %s21, 0
    %p132 = por %p130, %p131
    %s134 = sadd.s32 %s133, 1
    %p137 = scmp.eq.s32.totalorder %s15, 1
    %p138 = scmp.ne.s32.totalorder %s133, %s135
    %p139 = scmp.eq.s32.totalorder %s15, 0
    %p140 = por %p138, %p139
    %p141 = scmp.ne.s32.totalorder %s133, %s135
    %p142 = scmp.eq.s32.totalorder %s20, 1
    %p143 = por %p141, %p142
    %p144 = scmp.ne.s32.totalorder %s135, %s136
    %p145 = scmp.eq.s32.totalorder %s20, 0
    %p146 = por %p144, %p145
    %p147 = scmp.ne.s32.totalorder %s135, %s136
    %p148 = scmp.eq.s32.totalorder %s21, 1
    %p149 = por %p147, %p148
    %p151 = scmp.ne.s32.totalorder %s136, %s150
    %p152 = scmp.eq.s32.totalorder %s21, 0
    %p153 = por %p151, %p152
    %s155 = sadd.s32 %s154, 1
    %p158 = scmp.eq.s32.totalorder %s15, 1
    %p159 = scmp.ne.s32.totalorder %s154, %s156
    %p160 = scmp.eq.s32.totalorder %s15, 0
    %p161 = por %p159, %p160
    %p162 = scmp.ne.s32.totalorder %s154, %s156
    %p163 = scmp.eq.s32.totalorder %s20, 1
    %p164 = por %p162, %p163
    %p165 = scmp.ne.s32.totalorder %s156, %s157
    %p166 = scmp.eq.s32.totalorder %s20, 0
    %p167 = por %p165, %p166
    %p168 = scmp.ne.s32.totalorder %s156, %s157
    %p169 = scmp.eq.s32.totalorder %s21, 1
    %p170 = por %p168, %p169
    %p172 = scmp.ne.s32.totalorder %s157, %s171
    %p173 = scmp.eq.s32.totalorder %s21, 0
    %p174 = por %p172, %p173
    %s175 = ssub.s32 %s22, %s34
    %p176 = scmp.eq.s32.totalorder %s175, 0
    %s178 = sadd.s32 %s177, 1
    %s179 = scalar_select %p176, %s177, %s178
    %p182 = pneg %p176
    %p183 = scmp.eq.s32.totalorder %s15, 1
    %p184 = por %p182, %p183
    %p185 = scmp.ne.s32.totalorder %s177, %s180
    %p186 = scmp.eq.s32.totalorder %s15, 0
    %p187 = por %p185, %p186
    %p188 = scmp.ne.s32.totalorder %s177, %s180
    %p189 = scmp.eq.s32.totalorder %s20, 1
    %p190 = por %p188, %p189
    %p191 = scmp.ne.s32.totalorder %s180, %s181
    %p192 = scmp.eq.s32.totalorder %s20, 0
    %p193 = por %p191, %p192
    %p194 = scmp.ne.s32.totalorder %s180, %s181
    %p195 = scmp.eq.s32.totalorder %s21, 1
    %p196 = por %p194, %p195
    %p198 = scmp.ne.s32.totalorder %s181, %s197
    %p199 = scmp.eq.s32.totalorder %s21, 0
    %p200 = por %p198, %p199
    %s202 = sadd.s32 %s201, 1
    %p205 = scmp.eq.s32.totalorder %s15, 1
    %p206 = scmp.ne.s32.totalorder %s201, %s203
    %p207 = scmp.eq.s32.totalorder %s15, 0
    %p208 = por %p206, %p207
    %p209 = scmp.ne.s32.totalorder %s201, %s203
    %p210 = scmp.eq.s32.totalorder %s20, 1
    %p211 = por %p209, %p210
    %p212 = scmp.ne.s32.totalorder %s203, %s204
    %p213 = scmp.eq.s32.totalorder %s20, 0
    %p214 = por %p212, %p213
    %p215 = scmp.ne.s32.totalorder %s203, %s204
    %p216 = scmp.eq.s32.totalorder %s21, 1
    %p217 = por %p215, %p216
    %p219 = scmp.ne.s32.totalorder %s204, %s218
    %p220 = scmp.eq.s32.totalorder %s21, 0
    %p221 = por %p219, %p220
    %s223 = sadd.s32 %s222, 1
    %p226 = scmp.eq.s32.totalorder %s15, 1
    %p227 = scmp.ne.s32.totalorder %s222, %s224
    %p228 = scmp.eq.s32.totalorder %s15, 0
    %p229 = por %p227, %p228
    %p230 = scmp.ne.s32.totalorder %s222, %s224
    %p231 = scmp.eq.s32.totalorder %s20, 1
    %p232 = por %p230, %p231
    %p233 = scmp.ne.s32.totalorder %s224, %s225
    %p234 = scmp.eq.s32.totalorder %s20, 0
    %p235 = por %p233, %p234
    %p236 = scmp.ne.s32.totalorder %s224, %s225
    %p237 = scmp.eq.s32.totalorder %s21, 1
    %p238 = por %p236, %p237
    %p240 = scmp.ne.s32.totalorder %s225, %s239
    %p241 = scmp.eq.s32.totalorder %s21, 0
    %p242 = por %p240, %p241
    %s243 = ssub.s32 %s22, %s34
    %s244 = ssub.s32 %s23, %s30
    %s245 = sor.u32 %s243, %s244
    %p246 = scmp.eq.s32.totalorder %s245, 0
    %s248 = sadd.s32 %s247, 1
    %s249 = scalar_select %p246, %s247, %s248
    %p252 = pneg %p246
    %p253 = scmp.eq.s32.totalorder %s15, 1
    %p254 = por %p252, %p253
    %p255 = scmp.ne.s32.totalorder %s247, %s250
    %p256 = scmp.eq.s32.totalorder %s15, 0
    %p257 = por %p255, %p256
    %p258 = scmp.ne.s32.totalorder %s247, %s250
    %p259 = scmp.eq.s32.totalorder %s20, 1
    %p260 = por %p258, %p259
    %p261 = scmp.ne.s32.totalorder %s250, %s251
    %p262 = scmp.eq.s32.totalorder %s20, 0
    %p263 = por %p261, %p262
    %p264 = scmp.ne.s32.totalorder %s250, %s251
    %p265 = scmp.eq.s32.totalorder %s21, 1
    %p266 = por %p264, %p265
    %p268 = scmp.ne.s32.totalorder %s251, %s267
    %p269 = scmp.eq.s32.totalorder %s21, 0
    %p270 = por %p268, %p269
    %p271 = scmp.le.s32.totalorder 1, %s15
    %p272 = scmp.lt.s32.totalorder %s15, 3
    %p273 = pnand %p271, %p272
    %p274 = pneg %p273
    // Predicated region
    $region9: #{_ffm_impl.3} parent=5 // pred_check
      _
    $region10: #{_ffm_impl.3} parent=5 // pred_check_branch
      %276 = sbr.rel (%p273) target = $region12
    $region11: #{_ffm_impl.3} parent=5 // pred_region
      %s277 = ssub.s32 %s15, 1
      // Predicated region
      $region13: #{_ffm_impl.3} parent=11 // pred_check
        %p278 = pneg %p104
      $region14: #{_ffm_impl.3} parent=11 // pred_check_branch
        %280 = sbr.rel (%p278) target = $region16
      $region15: #{_ffm_impl.3} parent=11 // pred_region
        _
      $region16: #{_ffm_impl.3} parent=11 // pred_fallthru
        _
      // Predicated region
      $region17: #{_ffm_impl.3} parent=11 // pred_check
        %p281 = pneg %p125
      $region18: #{_ffm_impl.3} parent=11 // pred_check_branch
        %283 = sbr.rel (%p281) target = $region20
      $region19: #{_ffm_impl.3} parent=11 // pred_region
        _
      $region20: #{_ffm_impl.3} parent=11 // pred_fallthru
        _
      // Predicated region
      $region21: #{_ffm_impl.3} parent=11 // pred_check
        %p284 = pneg %p146
      $region22: #{_ffm_impl.3} parent=11 // pred_check_branch
        %286 = sbr.rel (%p284) target = $region24
      $region23: #{_ffm_impl.3} parent=11 // pred_region
        _
      $region24: #{_ffm_impl.3} parent=11 // pred_fallthru
        _
      // Predicated region
      $region25: #{_ffm_impl.3} parent=11 // pred_check
        %p287 = pneg %p167
      $region26: #{_ffm_impl.3} parent=11 // pred_check_branch
        %289 = sbr.rel (%p287) target = $region28
      $region27: #{_ffm_impl.3} parent=11 // pred_region
        _
      $region28: #{_ffm_impl.3} parent=11 // pred_fallthru
        _
      // Predicated region
      $region29: #{_ffm_impl.3} parent=11 // pred_check
        %p290 = pneg %p214
      $region30: #{_ffm_impl.3} parent=11 // pred_check_branch
        %292 = sbr.rel (%p290) target = $region32
      $region31: #{_ffm_impl.3} parent=11 // pred_region
        _
      $region32: #{_ffm_impl.3} parent=11 // pred_fallthru
        _
      // Predicated region
      $region33: #{_ffm_impl.3} parent=11 // pred_check
        %p293 = pneg %p235
      $region34: #{_ffm_impl.3} parent=11 // pred_check_branch
        %295 = sbr.rel (%p293) target = $region36
      $region35: #{_ffm_impl.3} parent=11 // pred_region
        _
      $region36: #{_ffm_impl.3} parent=11 // pred_fallthru
        _
    $region12: #{_ffm_impl.3} parent=5 // pred_fallthru
      _
    %p296 = scmp.lt.s32.totalorder %s15, 2
    // Predicated region
    $region37: #{_ffm_impl.3} parent=5 // pred_check
      %p297 = pneg %p296
    $region38: #{_ffm_impl.3} parent=5 // pred_check_branch
      %299 = sbr.rel (%p297) target = $region40
    $region39: #{_ffm_impl.3} parent=5 // pred_region
      // Predicated region
      $region41: #{_ffm_impl.3} parent=39 // pred_check
        %p300 = pneg %p49
      $region42: #{_ffm_impl.3} parent=39 // pred_check_branch
        %302 = sbr.rel (%p300) target = $region44
      $region43: #{_ffm_impl.3} parent=39 // pred_region
        %s303 = smul.u32 2, %s23
        %p304 = scmp.lt.s32.totalorder %s22, 1
        %s305 = scalar_select %p304, %s22, 1
        %p306 = scmp.lt.s32.totalorder %s303, 1
        %s307 = scalar_select %p306, %s303, 1
        %s308 = smul.addr %s305, 2
        %s309 = sadd.s32 %s307, %s308
        %s310 = smul.addr %s309, 4
        %s311 = scalar_lea.vmem %s0, %s310
        %s312 = smul.u32 2, %s23
      $region44: #{_ffm_impl.3} parent=39 // pred_fallthru
        _
      // Predicated region
      $region45: #{_ffm_impl.3} parent=39 // pred_check
        %p313 = pneg %p77
      $region46: #{_ffm_impl.3} parent=39 // pred_check_branch
        %315 = sbr.rel (%p313) target = $region48
      $region47: #{_ffm_impl.3} parent=39 // pred_region
        %s316 = smul.u32 2, %s23
        %p317 = scmp.lt.s32.totalorder %s22, 1
        %s318 = scalar_select %p317, %s22, 1
        %p319 = scmp.lt.s32.totalorder %s316, 1
        %s320 = scalar_select %p319, %s316, 1
        %s321 = smul.addr %s318, 2
        %s322 = sadd.s32 %s320, %s321
        %s323 = smul.addr %s322, 4
        %s324 = scalar_lea.vmem %s1, %s323
        %s325 = smul.u32 2, %s23
      $region48: #{_ffm_impl.3} parent=39 // pred_fallthru
        _
      // Predicated region
      $region49: #{_ffm_impl.3} parent=39 // pred_check
        %p326 = pneg %p187
      $region50: #{_ffm_impl.3} parent=39 // pred_check_branch
        %328 = sbr.rel (%p326) target = $region52
      $region51: #{_ffm_impl.3} parent=39 // pred_region
        %p329 = scmp.lt.s32.totalorder %s22, 1
        %s330 = scalar_select %p329, %s22, 1
        %s331 = smul.addr %s330, 2
        %s332 = smul.addr %s331, 8
        %s333 = scalar_lea.vmem %s6, %s332
      $region52: #{_ffm_impl.3} parent=39 // pred_fallthru
        _
    $region40: #{_ffm_impl.3} parent=5 // pred_fallthru
      _
    %p334 = scmp.le.s32.totalorder 1, %s15
    %p335 = scmp.lt.s32.totalorder %s15, 3
    %p336 = pnand %p334, %p335
    %p337 = pneg %p336
    // Predicated region
    $region53: #{_ffm_impl.3} parent=5 // pred_check
      _
    $region54: #{_ffm_impl.3} parent=5 // pred_check_branch
      %339 = sbr.rel (%p336) target = $region56
    $region55: #{_ffm_impl.3} parent=5 // pred_region
      %s340 = ssub.s32 %s15, 1
      %s341 = smul.u32 2, %s25
      %p342 = scmp.lt.s32.totalorder %s24, 1
      %s343 = scalar_select %p342, %s24, 1
      %p344 = scmp.lt.s32.totalorder %s341, 1
      %s345 = scalar_select %p344, %s341, 1
      %s346 = smul.addr %s343, 2
      %s347 = sadd.s32 %s345, %s346
      %s348 = smul.addr %s347, 4
      %s349 = scalar_lea.vmem %s0, %s348
      %p350 = pneg %p55
      %p351 = pneg %p52
      %s352 = smul.u32 2, %s25
      %p353 = scmp.lt.s32.totalorder %s24, 1
      %s354 = scalar_select %p353, %s24, 1
      %p355 = scmp.lt.s32.totalorder %s352, 1
      %s356 = scalar_select %p355, %s352, 1
      %s357 = smul.addr %s354, 2
      %s358 = sadd.s32 %s356, %s357
      %s359 = smul.addr %s358, 4
      %s360 = scalar_lea.vmem %s1, %s359
      %p361 = pneg %p83
      %p362 = pneg %p80
      %p363 = pneg %p104
      %p364 = pneg %p101
      %p365 = pneg %p125
      %p366 = pneg %p122
      %p367 = pneg %p146
      %p368 = pneg %p143
      %p369 = pneg %p167
      %p370 = pneg %p164
      %p371 = scmp.lt.s32.totalorder %s24, 1
      %s372 = scalar_select %p371, %s24, 1
      %s373 = smul.addr %s372, 2
      %s374 = smul.addr %s373, 8
      %s375 = scalar_lea.vmem %s6, %s374
      %p376 = pneg %p193
      %p377 = pneg %p190
      %p378 = pneg %p214
      %p379 = pneg %p211
      %p380 = pneg %p235
      %p381 = pneg %p232
      %p382 = pneg %p263
      %p383 = pneg %p260
      %s384 = smul.u32 2, %s25
      %p385 = scmp.lt.s32.totalorder %s24, 1
      %s386 = scalar_select %p385, %s24, 1
      %p387 = scmp.lt.s32.totalorder %s384, 1
      %s388 = scalar_select %p387, %s384, 1
      %s389 = smul.addr %s386, 4
      %s390 = sadd.s32 %s388, %s389
      %s391 = smul.addr %s390, 8
      %s392 = scalar_lea.vmem %s9, %s391
      %s393 = smul.u32 2, %s25
      %p394 = scmp.lt.s32.totalorder %s24, 1
      %s395 = scalar_select %p394, %s24, 1
      %p396 = scmp.lt.s32.totalorder %s393, 1
      %s397 = scalar_select %p396, %s393, 1
      %s398 = smul.addr %s395, 2
      %s399 = sadd.s32 %s397, %s398
      %s400 = smul.addr %s399, 4
      %s401 = scalar_lea.vmem %s0, %s400
      %s402 = smul.u32 2, %s25
      %s403 = smul.u32 2, %s25
      %p404 = scmp.lt.s32.totalorder %s24, 1
      %s405 = scalar_select %p404, %s24, 1
      %p406 = scmp.lt.s32.totalorder %s403, 1
      %s407 = scalar_select %p406, %s403, 1
      %s408 = smul.addr %s405, 2
      %s409 = sadd.s32 %s407, %s408
      %s410 = smul.addr %s409, 4
      %s411 = scalar_lea.vmem %s1, %s410
      %s412 = smul.u32 2, %s25
      %p413 = scmp.lt.s32.totalorder %s24, 1
      %s414 = scalar_select %p413, %s24, 1
      %s415 = smul.addr %s414, 2
      %s416 = smul.addr %s415, 8
      %s417 = scalar_lea.vmem %s6, %s416
      %s418 = smul.u32 2, %s25
      %p419 = scmp.lt.s32.totalorder %s24, 1
      %s420 = scalar_select %p419, %s24, 1
      %p421 = scmp.lt.s32.totalorder %s418, 1
      %s422 = scalar_select %p421, %s418, 1
      %s423 = smul.addr %s420, 4
      %s424 = sadd.s32 %s422, %s423
      %s425 = smul.addr %s424, 8
      %s426 = scalar_lea.vmem %s9, %s425
      %s427 = smul.u32 2, %s25
      %v428 = vld [vmem:[%s2] sm:$0xff]
      %v429 = vld [vmem:[%s2 + $0x8] sm:$0xff]
      %v430 = vld [vmem:[%s401] sm:$0xff]
      %v431 = vld [vmem:[%s3] sm:$0xff]
      %v432 = vld [vmem:[%s3 + $0x8] sm:$0xff]
      %v433 = vld [vmem:[%s411] sm:$0xff]
      %v435 = vcombine.high %v433, %v433
      %vm436 = vcmask 31744
      %v438 = vsel %vm436, %v431, 0
      %v441 = vsel %vm436, %v432, 0
      %vm443 = vcmask 1043456
      %v444 = vsel %vm443, %v433, 0
      %v446 = vsel %vm443, %v435, 0
      %448 = vmatprep.subr.mxu0 0.0
      %449 = vmatpush1.msra.mxu0 0.0
      %450 = vmatprep.subr.mxu0 0.0
      %451 = vmatpush1.msra.mxu0 0.0
      %452 = vmatprep.subr.mxu0 0.0
      %453 = vmatpush1.msra.mxu0 0.0
      %454 = vmatprep.subr.mxu0 0.0
      %455 = vmatpush1.msra.mxu0 0.0
      %456 = vmatprep.subr.mxu0 0.0
      %457 = vmatpush1.msra.mxu0 0.0
      %458 = vmatprep.subr.mxu0 0.0
      %459 = vmatpush1.msra.mxu0 0.0
      %460 = vmatprep.subr.mxu0 0.0
      %461 = vmatpush1.msra.mxu0 0.0
      %462 = vmatprep.subr.mxu0 0.0
      %463 = vmatpush1.msra.mxu0 0.0
      %464 = vmatprep.subr.mxu0 0.0
      %465 = vmatpush1.msra.mxu0 0.0
      %466 = vmatprep.subr.mxu0 0.0
      %467 = vmatpush1.msra.mxu0 0.0
      %468 = vmatprep.subr.mxu0 0.0
      %469 = vmatpush1.msra.mxu0 0.0
      %470 = vmatprep.subr.mxu0 0.0
      %471 = vmatpush1.msra.mxu0 0.0
      %472 = vmatprep.subr.mxu0 0.0
      %473 = vmatpush1.msra.mxu0 0.0
      %474 = vmatprep.subr.mxu0 0.0
      %475 = vmatpush1.msra.mxu0 0.0
      %476 = vmatprep.subr.mxu0 0.0
      %477 = vmatpush1.msra.mxu0 0.0
      %478 = vmatprep.subr.mxu0 %v446
      %479 = vmatpush1.msra.mxu0 %v444
      %480 = vmatprep.subr.mxu0 0.0
      %481 = vmatpush2.msra.mxu0 0.0
      %482 = vmatprep.subr.mxu0 0.0
      %483 = vmatpush2.msra.mxu0 0.0
      %484 = vmatprep.subr.mxu0 0.0
      %485 = vmatpush2.msra.mxu0 0.0
      %486 = vmatprep.subr.mxu0 0.0
      %487 = vmatpush2.msra.mxu0 0.0
      %488 = vmatprep.subr.mxu0 0.0
      %489 = vmatpush2.msra.mxu0 0.0
      %490 = vmatprep.subr.mxu0 0.0
      %491 = vmatpush2.msra.mxu0 0.0
      %492 = vmatprep.subr.mxu0 0.0
      %493 = vmatpush2.msra.mxu0 0.0
      %494 = vmatprep.subr.mxu0 0.0
      %495 = vmatpush2.msra.mxu0 0.0
      %496 = vmatprep.subr.mxu0 0.0
      %497 = vmatpush2.msra.mxu0 0.0
      %498 = vmatprep.subr.mxu0 0.0
      %499 = vmatpush2.msra.mxu0 0.0
      %500 = vmatprep.subr.mxu0 0.0
      %501 = vmatpush2.msra.mxu0 0.0
      %502 = vmatprep.subr.mxu0 0.0
      %503 = vmatpush2.msra.mxu0 0.0
      %504 = vmatprep.subr.mxu0 0.0
      %505 = vmatpush2.msra.mxu0 0.0
      %506 = vmatprep.subr.mxu0 0.0
      %507 = vmatpush2.msra.mxu0 0.0
      %508 = vmatprep.subr.mxu0 0.0
      %509 = vmatpush2.msra.mxu0 0.0
      %510 = vmatprep.subr.mxu0 0.0
      %511 = vmatpush2.msra.mxu0 0.0
      %512 = vmatprep.mubr.f32.mxu0 0.0
      %513 = vmatmul.mubr.f32.gmra.mxu0 %v438
      %v514 = vpop.f32.mrf.mxu0
      %v515 = vadd.f32 0.0, %v514
      %v516 = vpop.f32.mrf.mxu0
      %v517 = vadd.f32 0.0, %v516
      %518 = vmatprep.mubr.f32.mxu0 0.0
      %519 = vmatmul.mubr.f32.gmra.mxu0 %v441
      %v520 = vpop.f32.mrf.mxu0
      %v521 = vadd.f32 0.0, %v520
      %v522 = vpop.f32.mrf.mxu0
      %v523 = vadd.f32 0.0, %v522
      %524 = vdwg.mxu0
      %v526 = vcombine.high %v430, %v430
      %v528 = vsel %vm436, %v428, 0
      %v531 = vsel %vm436, %v429, 0
      %v533 = vsel %vm443, %v430, 0
      %v535 = vsel %vm443, %v526, 0
      %537 = vmatprep.subr.mxu0 0.0
      %538 = vmatpush1.msra.mxu0 0.0
      %539 = vmatprep.subr.mxu0 0.0
      %540 = vmatpush1.msra.mxu0 0.0
      %541 = vmatprep.subr.mxu0 0.0
      %542 = vmatpush1.msra.mxu0 0.0
      %543 = vmatprep.subr.mxu0 0.0
      %544 = vmatpush1.msra.mxu0 0.0
      %545 = vmatprep.subr.mxu0 0.0
      %546 = vmatpush1.msra.mxu0 0.0
      %547 = vmatprep.subr.mxu0 0.0
      %548 = vmatpush1.msra.mxu0 0.0
      %549 = vmatprep.subr.mxu0 0.0
      %550 = vmatpush1.msra.mxu0 0.0
      %551 = vmatprep.subr.mxu0 0.0
      %552 = vmatpush1.msra.mxu0 0.0
      %553 = vmatprep.subr.mxu0 0.0
      %554 = vmatpush1.msra.mxu0 0.0
      %555 = vmatprep.subr.mxu0 0.0
      %556 = vmatpush1.msra.mxu0 0.0
      %557 = vmatprep.subr.mxu0 0.0
      %558 = vmatpush1.msra.mxu0 0.0
      %559 = vmatprep.subr.mxu0 0.0
      %560 = vmatpush1.msra.mxu0 0.0
      %561 = vmatprep.subr.mxu0 0.0
      %562 = vmatpush1.msra.mxu0 0.0
      %563 = vmatprep.subr.mxu0 0.0
      %564 = vmatpush1.msra.mxu0 0.0
      %565 = vmatprep.subr.mxu0 0.0
      %566 = vmatpush1.msra.mxu0 0.0
      %567 = vmatprep.subr.mxu0 %v535
      %568 = vmatpush1.msra.mxu0 %v533
      %569 = vmatprep.subr.mxu0 0.0
      %570 = vmatpush2.msra.mxu0 0.0
      %571 = vmatprep.subr.mxu0 0.0
      %572 = vmatpush2.msra.mxu0 0.0
      %573 = vmatprep.subr.mxu0 0.0
      %574 = vmatpush2.msra.mxu0 0.0
      %575 = vmatprep.subr.mxu0 0.0
      %576 = vmatpush2.msra.mxu0 0.0
      %577 = vmatprep.subr.mxu0 0.0
      %578 = vmatpush2.msra.mxu0 0.0
      %579 = vmatprep.subr.mxu0 0.0
      %580 = vmatpush2.msra.mxu0 0.0
      %581 = vmatprep.subr.mxu0 0.0
      %582 = vmatpush2.msra.mxu0 0.0
      %583 = vmatprep.subr.mxu0 0.0
      %584 = vmatpush2.msra.mxu0 0.0
      %585 = vmatprep.subr.mxu0 0.0
      %586 = vmatpush2.msra.mxu0 0.0
      %587 = vmatprep.subr.mxu0 0.0
      %588 = vmatpush2.msra.mxu0 0.0
      %589 = vmatprep.subr.mxu0 0.0
      %590 = vmatpush2.msra.mxu0 0.0
      %591 = vmatprep.subr.mxu0 0.0
      %592 = vmatpush2.msra.mxu0 0.0
      %593 = vmatprep.subr.mxu0 0.0
      %594 = vmatpush2.msra.mxu0 0.0
      %595 = vmatprep.subr.mxu0 0.0
      %596 = vmatpush2.msra.mxu0 0.0
      %597 = vmatprep.subr.mxu0 0.0
      %598 = vmatpush2.msra.mxu0 0.0
      %599 = vmatprep.subr.mxu0 0.0
      %600 = vmatpush2.msra.mxu0 0.0
      %601 = vmatprep.mubr.f32.mxu0 0.0
      %602 = vmatmul.mubr.f32.gmra.mxu0 %v528
      %v603 = vpop.f32.mrf.mxu0
      %v604 = vadd.f32 %v515, %v603
      %v605 = vpop.f32.mrf.mxu0
      %v606 = vadd.f32 %v517, %v605
      %607 = vmatprep.mubr.f32.mxu0 0.0
      %608 = vmatmul.mubr.f32.gmra.mxu0 %v531
      %v609 = vpop.f32.mrf.mxu0
      %v610 = vadd.f32 %v521, %v609
      %v611 = vpop.f32.mrf.mxu0
      %v612 = vadd.f32 %v523, %v611
      %613 = vdwg.mxu0
      %v614 = vld [vmem:[%s4] sm:$0xff]
      %v615 = vld [vmem:[%s4 + $0x8] sm:$0xff]
      %617 = vset.pattern.permute.xlu0 0
      %618 = vperm.xlu0 %617, %v614
      %v619 = vpop.permute.xlu0 %618
      %622 = vset.pattern.permute.xlu0 0
      %623 = vperm.xlu0 %622, %v615
      %v624 = vpop.permute.xlu0 %623
      %v626 = vmul.f32 %v604, %v619
      %v627 = vmul.f32 %v606, %v619
      %v628 = vmul.f32 %v610, %v624
      %v629 = vmul.f32 %v612, %v624
      %v630 = vld [vmem:[%s5] sm:$0xff]
      %v631 = vld [vmem:[%s5 + $0x8] sm:$0xff]
      %633 = vset.pattern.permute.xlu0 0
      %634 = vperm.xlu0 %633, %v630
      %v635 = vpop.permute.xlu0 %634
      %638 = vset.pattern.permute.xlu0 0
      %639 = vperm.xlu0 %638, %v631
      %v640 = vpop.permute.xlu0 %639
      %v642 = vadd.f32 %v626, %v635
      %v643 = vadd.f32 %v627, %v635
      %v644 = vadd.f32 %v628, %v640
      %v645 = vadd.f32 %v629, %v640
      %v646 = vmax.f32 %v642, 0.0
      %v647 = vmax.f32 %v643, 0.0
      %v648 = vmax.f32 %v644, 0.0
      %v649 = vmax.f32 %v645, 0.0
      %v650 = vld [vmem:[%s7] sm:$0xf]
      %v651 = vld [vmem:[%s417] sm:$0xff]
      %v652 = vld [vmem:[%s417 + $0x8] sm:$0xff]
      %vm653 = vcmask 130048
      %v655 = vsel %vm653, %v650, 0
      %657 = vmatprep.subr.mxu0 0.0
      %658 = vmatpush1.msra.mxu0 0.0
      %659 = vmatprep.subr.mxu0 0.0
      %660 = vmatpush1.msra.mxu0 0.0
      %661 = vmatprep.subr.mxu0 0.0
      %662 = vmatpush1.msra.mxu0 0.0
      %663 = vmatprep.subr.mxu0 0.0
      %664 = vmatpush1.msra.mxu0 0.0
      %665 = vmatprep.subr.mxu0 0.0
      %666 = vmatpush1.msra.mxu0 0.0
      %667 = vmatprep.subr.mxu0 0.0
      %668 = vmatpush1.msra.mxu0 0.0
      %669 = vmatprep.subr.mxu0 0.0
      %670 = vmatpush1.msra.mxu0 0.0
      %671 = vmatprep.subr.mxu0 0.0
      %672 = vmatpush1.msra.mxu0 0.0
      %673 = vmatprep.subr.mxu0 0.0
      %674 = vmatpush1.msra.mxu0 0.0
      %675 = vmatprep.subr.mxu0 0.0
      %676 = vmatpush1.msra.mxu0 0.0
      %677 = vmatprep.subr.mxu0 0.0
      %678 = vmatpush1.msra.mxu0 0.0
      %679 = vmatprep.subr.mxu0 0.0
      %680 = vmatpush1.msra.mxu0 0.0
      %681 = vmatprep.subr.mxu0 0.0
      %682 = vmatpush1.msra.mxu0 0.0
      %683 = vmatprep.subr.mxu0 0.0
      %684 = vmatpush1.msra.mxu0 0.0
      %685 = vmatprep.subr.mxu0 0.0
      %686 = vmatpush1.msra.mxu0 %v652
      %687 = vmatprep.subr.mxu0 0.0
      %688 = vmatpush1.msra.mxu0 %v651
      %689 = vmatprep.subr.mxu0 0.0
      %690 = vmatpush2.msra.mxu0 0.0
      %691 = vmatprep.subr.mxu0 0.0
      %692 = vmatpush2.msra.mxu0 0.0
      %693 = vmatprep.subr.mxu0 0.0
      %694 = vmatpush2.msra.mxu0 0.0
      %695 = vmatprep.subr.mxu0 0.0
      %696 = vmatpush2.msra.mxu0 0.0
      %697 = vmatprep.subr.mxu0 0.0
      %698 = vmatpush2.msra.mxu0 0.0
      %699 = vmatprep.subr.mxu0 0.0
      %700 = vmatpush2.msra.mxu0 0.0
      %701 = vmatprep.subr.mxu0 0.0
      %702 = vmatpush2.msra.mxu0 0.0
      %703 = vmatprep.subr.mxu0 0.0
      %704 = vmatpush2.msra.mxu0 0.0
      %705 = vmatprep.subr.mxu0 0.0
      %706 = vmatpush2.msra.mxu0 0.0
      %707 = vmatprep.subr.mxu0 0.0
      %708 = vmatpush2.msra.mxu0 0.0
      %709 = vmatprep.subr.mxu0 0.0
      %710 = vmatpush2.msra.mxu0 0.0
      %711 = vmatprep.subr.mxu0 0.0
      %712 = vmatpush2.msra.mxu0 0.0
      %713 = vmatprep.subr.mxu0 0.0
      %714 = vmatpush2.msra.mxu0 0.0
      %715 = vmatprep.subr.mxu0 0.0
      %716 = vmatpush2.msra.mxu0 0.0
      %717 = vmatprep.subr.mxu0 0.0
      %718 = vmatpush2.msra.mxu0 0.0
      %719 = vmatprep.subr.mxu0 0.0
      %720 = vmatpush2.msra.mxu0 0.0
      %721 = vmatprep.mubr.f32.mxu0 0.0
      %722 = vmatmul.mubr.f32.gmra.mxu0 %v655
      %v723 = vpop.f32.mrf.mxu0
      %v724 = vadd.f32 0.0, %v723
      %v725 = vpop.f32.mrf.mxu0
      %726 = vdwg.mxu0
      %v727 = vmax.f32 %v724, 0.0
      %v728 = vld [vmem:[%s8] sm:$0xff]
      %v729 = vld [vmem:[%s8 + $0x8] sm:$0xff]
      %v731 = vsel %vm436, %v728, 0
      %v734 = vsel %vm436, %v729, 0
      %v737 = vsel %vm443, %v727, 0
      %739 = vmatprep.subr.mxu0 0.0
      %740 = vmatpush1.msra.mxu0 0.0
      %741 = vmatprep.subr.mxu0 0.0
      %742 = vmatpush1.msra.mxu0 0.0
      %743 = vmatprep.subr.mxu0 0.0
      %744 = vmatpush1.msra.mxu0 0.0
      %745 = vmatprep.subr.mxu0 0.0
      %746 = vmatpush1.msra.mxu0 0.0
      %747 = vmatprep.subr.mxu0 0.0
      %748 = vmatpush1.msra.mxu0 0.0
      %749 = vmatprep.subr.mxu0 0.0
      %750 = vmatpush1.msra.mxu0 0.0
      %751 = vmatprep.subr.mxu0 0.0
      %752 = vmatpush1.msra.mxu0 0.0
      %753 = vmatprep.subr.mxu0 0.0
      %754 = vmatpush1.msra.mxu0 0.0
      %755 = vmatprep.subr.mxu0 0.0
      %756 = vmatpush1.msra.mxu0 0.0
      %757 = vmatprep.subr.mxu0 0.0
      %758 = vmatpush1.msra.mxu0 0.0
      %759 = vmatprep.subr.mxu0 0.0
      %760 = vmatpush1.msra.mxu0 0.0
      %761 = vmatprep.subr.mxu0 0.0
      %762 = vmatpush1.msra.mxu0 0.0
      %763 = vmatprep.subr.mxu0 0.0
      %764 = vmatpush1.msra.mxu0 0.0
      %765 = vmatprep.subr.mxu0 0.0
      %766 = vmatpush1.msra.mxu0 0.0
      %767 = vmatprep.subr.mxu0 0.0
      %768 = vmatpush1.msra.mxu0 0.0
      %769 = vmatprep.subr.mxu0 0.0
      %770 = vmatpush1.msra.mxu0 %v737
      %771 = vmatprep.subr.mxu0 0.0
      %772 = vmatpush2.msra.mxu0 0.0
      %773 = vmatprep.subr.mxu0 0.0
      %774 = vmatpush2.msra.mxu0 0.0
      %775 = vmatprep.subr.mxu0 0.0
      %776 = vmatpush2.msra.mxu0 0.0
      %777 = vmatprep.subr.mxu0 0.0
      %778 = vmatpush2.msra.mxu0 0.0
      %779 = vmatprep.subr.mxu0 0.0
      %780 = vmatpush2.msra.mxu0 0.0
      %781 = vmatprep.subr.mxu0 0.0
      %782 = vmatpush2.msra.mxu0 0.0
      %783 = vmatprep.subr.mxu0 0.0
      %784 = vmatpush2.msra.mxu0 0.0
      %785 = vmatprep.subr.mxu0 0.0
      %786 = vmatpush2.msra.mxu0 0.0
      %787 = vmatprep.subr.mxu0 0.0
      %788 = vmatpush2.msra.mxu0 0.0
      %789 = vmatprep.subr.mxu0 0.0
      %790 = vmatpush2.msra.mxu0 0.0
      %791 = vmatprep.subr.mxu0 0.0
      %792 = vmatpush2.msra.mxu0 0.0
      %793 = vmatprep.subr.mxu0 0.0
      %794 = vmatpush2.msra.mxu0 0.0
      %795 = vmatprep.subr.mxu0 0.0
      %796 = vmatpush2.msra.mxu0 0.0
      %797 = vmatprep.subr.mxu0 0.0
      %798 = vmatpush2.msra.mxu0 0.0
      %799 = vmatprep.subr.mxu0 0.0
      %800 = vmatpush2.msra.mxu0 0.0
      %801 = vmatprep.subr.mxu0 0.0
      %802 = vmatpush2.msra.mxu0 0.0
      %803 = vmatprep.mubr.f32.mxu0 0.0
      %804 = vmatmul.mubr.f32.gmra.mxu0 %v731
      %v805 = vpop.f32.mrf.mxu0
      %v806 = vadd.f32 0.0, %v805
      %v807 = vpop.f32.mrf.mxu0
      %808 = vmatprep.mubr.f32.mxu0 0.0
      %809 = vmatmul.mubr.f32.gmra.mxu0 %v734
      %v810 = vpop.f32.mrf.mxu0
      %v811 = vadd.f32 0.0, %v810
      %v812 = vpop.f32.mrf.mxu0
      %813 = vdwg.mxu0
      %v814 = vsub.f32 0.0, %v806
      %v815 = vsub.f32 0.0, %v811
      %v816 = vmul.f32 %v814, 1.442695
      %v817 = vpow.pop %v816
      %v818 = vmul.f32 %v815, 1.442695
      %v819 = vpow.pop %v818
      %v820 = vadd.f32 %v817, 1.0
      %v821 = vadd.f32 %v819, 1.0
      %v822 = vrcp.pop %v820
      %v823 = vmul.f32 1.0, %v822
      %v824 = vrcp.pop %v821
      %v825 = vmul.f32 1.0, %v824
      %v826 = vadd.f32 %v823, 1.0
      %v827 = vadd.f32 %v825, 1.0
      %829 = vset.pattern.permute.xlu0 0
      %830 = vperm.xlu0 %829, %v826
      %v831 = vpop.permute.xlu0 %830
      %834 = vset.pattern.permute.xlu0 0
      %835 = vperm.xlu0 %834, %v827
      %v836 = vpop.permute.xlu0 %835
      %v838 = vmul.f32 %v646, %v831
      %v839 = vmul.f32 %v647, %v831
      %v840 = vmul.f32 %v648, %v836
      %v841 = vmul.f32 %v649, %v836
      %842 = vst [vmem:[%s426] sm:$0xff] %v838
      %843 = vst [vmem:[%s426 + $0x8] sm:$0xff] %v839
      %844 = vst [vmem:[%s426 + $0x10] sm:$0xff] %v840
      %845 = vst [vmem:[%s426 + $0x18] sm:$0xff] %v841
      %s846 = smul.u32 2, %s25
      %p847 = scmp.lt.s32.totalorder %s24, 1
      %s848 = scalar_select %p847, %s24, 1
      %p849 = scmp.lt.s32.totalorder %s846, 1
      %s850 = scalar_select %p849, %s846, 1
      %s851 = smul.addr %s848, 4
      %s852 = sadd.s32 %s850, %s851
      %s853 = smul.addr %s852, 8
      %s854 = scalar_lea.vmem %s9, %s853
      // Predicated region
      $region57: #{_ffm_impl.3} parent=55 // pred_check
        %p855 = pneg %p260
      $region58: #{_ffm_impl.3} parent=55 // pred_check_branch
        %857 = sbr.rel (%p855) target = $region60
      $region59: #{_ffm_impl.3} parent=55 // pred_region
        %s858 = smul.u32 2, %s25
      $region60: #{_ffm_impl.3} parent=55 // pred_fallthru
        _
    $region56: #{_ffm_impl.3} parent=5 // pred_fallthru
      _
    %p859 = scmp.le.s32.totalorder 2, %s15
    // Predicated region
    $region61: #{_ffm_impl.3} parent=5 // pred_check
      %p860 = pneg %p859
    $region62: #{_ffm_impl.3} parent=5 // pred_check_branch
      %862 = sbr.rel (%p860) target = $region64
    $region63: #{_ffm_impl.3} parent=5 // pred_region
      %s863 = ssub.s32 %s15, 2
      // Predicated region
      $region65: #{_ffm_impl.3} parent=63 // pred_check
        %p864 = pneg %p266
      $region66: #{_ffm_impl.3} parent=63 // pred_check_branch
        %866 = sbr.rel (%p864) target = $region68
      $region67: #{_ffm_impl.3} parent=63 // pred_region
        %s867 = smul.u32 2, %s27
        %p868 = scmp.lt.s32.totalorder %s26, 1
        %s869 = scalar_select %p868, %s26, 1
        %p870 = scmp.lt.s32.totalorder %s867, 1
        %s871 = scalar_select %p870, %s867, 1
        %s872 = smul.addr %s869, 4
        %s873 = sadd.s32 %s871, %s872
        %s874 = smul.addr %s873, 8
        %s875 = scalar_lea.vmem %s9, %s874
      $region68: #{_ffm_impl.3} parent=63 // pred_fallthru
        _
    $region64: #{_ffm_impl.3} parent=5 // pred_fallthru
      _
  $region6: #{_ffm_impl.3} parent=0 // loop_footer
    %s19 = sadd.s32 1, %s15
  $region7: #{_ffm_impl.3} parent=0 // loop_footer_branch
    %14 = sbr.rel target = $region3
  $region8: #{_ffm_impl.3} parent=0 // loop_exit
    _

</llo_original>
